<compile_context>
chip_gen: v7x
topology: tpu7x:2x2x1
jax: 0.10.0
libtpu: 0.0.40
codegen_flags: <defaults>
</compile_context>

<pallas_src>
import functools

import jax
import jax.numpy as jnp
from jax import lax
from jax.experimental import pallas as pl
from jax.experimental.pallas import tpu as pltpu


def _hash_u32(x):
    """murmur3 fmix32 finalizer, elementwise on uint32 (plain jnp ops -> TPU + interpret)."""
    x = x ^ (x >> jnp.uint32(16))
    x = x * jnp.uint32(0x85EBCA6B)
    x = x ^ (x >> jnp.uint32(13))
    x = x * jnp.uint32(0xC2B2AE35)
    x = x ^ (x >> jnp.uint32(16))
    return x


def _cgf_kernel(radius_sq, gamma, m_pad, m_real,
                salt_ref,
                anc_kp_ref, anc_ds_ref, pos_kp_ref, pos_ds_ref,
                bcl_ref, mask_ref,
                p_key_s, p_ds_s, fc_key_s, fc_ds_s, o_key_s, o_ds_s):
    b = pl.program_id(0)
    i = pl.program_id(1)          # anchor tile (parallel, lane-dense outputs)
    k = pl.program_id(2)          # streamed pos chunk (arbitrary)
    n_k = pl.num_programs(2)

    anc_kp = anc_kp_ref[0]        # (5,   TM)  channel-first: MXU rhs (K, N)
    anc_ds = anc_ds_ref[0]        # (C+2, TM)
    pos_kp = pos_kp_ref[0]        # (TP,  5)   channel-last:  MXU lhs (M, K)
    pos_ds = pos_ds_ref[0]        # (TP, C+2)
    tm = anc_kp.shape[1]
    tp = pos_kp.shape[0]

    # Pairwise SQUARED distances on the MXU; out[p, a] = ||anc_a - pos_p||^2 via the
    # augmented-K trick.  Standard (M,K)x(K,N) form -> no in-kernel transposes.
    kp_sq = jnp.maximum(jnp.dot(pos_kp, anc_kp, preferred_element_type=jnp.float32), 0.0)
    ds_sq = jnp.maximum(jnp.dot(pos_ds, anc_ds, preferred_element_type=jnp.float32), 0.0)

    # One shared random-key plane (24 bits, exact in f32) for both random selections.
    row_l = lax.broadcasted_iota(jnp.int32, (tp, tm), 0)
    col_l = lax.broadcasted_iota(jnp.int32, (tp, tm), 1)
    offset = (k * tp) * m_pad + i * tm                     # scalar
    salt = salt_ref[b].astype(jnp.uint32)                  # per-(seed, batch) salt from SMEM
    bits = _hash_u32((row_l * m_pad + col_l + offset).astype(jnp.uint32) ^ salt)
    key = (bits & jnp.uint32(0x00FFFFFF)).astype(jnp.int32).astype(jnp.float32)

    inside = kp_sq <= radius_sq
    if m_pad != m_real:                                    # static: exclude padded pos rows
        valid = row_l < (m_real - k * tp)
        inside = jnp.logical_and(inside, valid)
        outside = jnp.logical_and(kp_sq > radius_sq, valid)
        fc_key = jnp.where(valid, jnp.where(inside, kp_sq + 1e8, kp_sq), 3.0e38)
    else:
        outside = jnp.logical_not(inside)
        fc_key = jnp.where(inside, kp_sq + 1e8, kp_sq)     # torch's "+1000 on the distance"

    @pl.when(k == 0)
    def _init():
        p_key_s[...] = jnp.full((1, tm), -1.0, jnp.float32)
        p_ds_s[...] = jnp.zeros((1, tm), jnp.float32)
        fc_key_s[...] = jnp.full((1, tm), 3.0e38, jnp.float32)
        fc_ds_s[...] = jnp.zeros((1, tm), jnp.float32)
        o_key_s[...] = jnp.full((1, tm), -1.0, jnp.float32)
        # torch fallback: argmax over an all-zero row gathers pos index 0.
        o_ds_s[...] = ds_sq[0:1, :]

    neg1 = jnp.float32(-1.0)

    # (a) random positive: streaming max of the masked key (2 cross-sublane reduces).
    kpos = jnp.where(inside, key, neg1)
    cmax = jnp.max(kpos, axis=0, keepdims=True)
    cds = jnp.max(jnp.where(kpos == cmax, ds_sq, neg1), axis=0, keepdims=True)
    upd = cmax > p_key_s[...]
    p_ds_s[...] = jnp.where(upd, cds, p_ds_s[...])
    p_key_s[...] = jnp.where(upd, cmax, p_key_s[...])

    # (b) random outside-radius negative candidate (same key plane, disjoint support).
    kout = jnp.where(outside, key, neg1)
    omax = jnp.max(kout, axis=0, keepdims=True)
    ods = jnp.max(jnp.where(kout == omax, ds_sq, neg1), axis=0, keepdims=True)
    updo = omax > o_key_s[...]
    o_ds_s[...] = jnp.where(updo, ods, o_ds_s[...])
    o_key_s[...] = jnp.where(updo, omax, o_key_s[...])

    # (c) closest-outside-radius negative candidate (streaming min of augmented kp^2).
    fmin = jnp.min(fc_key, axis=0, keepdims=True)
    fds = jnp.max(jnp.where(fc_key == fmin, ds_sq, neg1), axis=0, keepdims=True)
    updf = fmin < fc_key_s[...]
    fc_ds_s[...] = jnp.where(updf, fds, fc_ds_s[...])
    fc_key_s[...] = jnp.where(updf, fmin, fc_key_s[...])

    @pl.when(k == n_k - 1)
    def _finalize():
        mask_f = (p_key_s[...] >= 0.0).astype(jnp.float32)        # any-inside, for free
        # sqrt only on the reduced (1, TM) vectors.
        positive_dist = jnp.sqrt(p_ds_s[...])
        far_close_dist = jnp.sqrt(fc_ds_s[...])
        outside_dist = jnp.sqrt(o_ds_s[...])
        # per-anchor fair coin choosing between the two negative candidates
        a_ids = lax.broadcasted_iota(jnp.int32, (1, tm), 1) + i * tm
        coin = _hash_u32(a_ids.astype(jnp.uint32) ^ salt ^ jnp.uint32(0xA511E9B3))
        sel = (coin & jnp.uint32(1)) == jnp.uint32(0)
        negative_dist = jnp.where(sel, far_close_dist, outside_dist)
        bcl_ref[0] = (positive_dist - negative_dist + gamma) * mask_f
        mask_ref[0] = mask_f


def _augment_anc(x):
    """(B, K, M) -> (B, K+2, M), channel-first rows [x; 1; ||x||^2]  (MXU rhs (K, N))."""
    x = x.astype(jnp.float32)
    sq = jnp.sum(x * x, axis=1, keepdims=True)
    return jnp.concatenate([x, jnp.ones_like(sq), sq], axis=1)


def _augment_pos(x):
    """(B, K, M) -> (B, M, K+2), channel-last rows [-2x, ||x||^2, 1]  (MXU lhs (M, K))."""
    x = jnp.transpose(x.astype(jnp.float32), (0, 2, 1))
    sq = jnp.sum(x * x, axis=2, keepdims=True)
    return jnp.concatenate([-2.0 * x, sq, jnp.ones_like(sq)], axis=2)


def _choose_tiles(m_pad, batch):
    # Anchor (lane) tile: 256 matches the v6e/v7x 256x256 MXU, but keep >= 2 "parallel"
    # grid steps so both v7x TensorCores get work.
    tm = 256 if (m_pad % 256 == 0 and batch * (m_pad // 256) >= 2) else 128
    # Streamed pos (sublane) chunk.
    if m_pad % 512 == 0:
        tp = 512
    elif m_pad % 256 == 0:
        tp = 256
    else:
        tp = 128
    return tm, tp


def _cgf_pairwise_core(anc_keypoints, anc_descriptors, pos_keypoints, pos_descriptors,
                       seed, cgf_radius, triple_loss_gamma):
    """Pallas core. Returns (before_clamp_loss (B, M), positive_mask_BM (B, M) as float)."""
    B, _, M = anc_keypoints.shape
    C = anc_descriptors.shape[1]
    m_pad = ((M + 127) // 128) * 128

    def pad_m(x):
        return x if m_pad == M else jnp.pad(x, ((0, 0), (0, 0), (0, m_pad - M)))

    anc_kp_aug = _augment_anc(pad_m(anc_keypoints))       # (B, 5,   m_pad)
    anc_ds_aug = _augment_anc(pad_m(anc_descriptors))     # (B, C+2, m_pad)
    pos_kp_aug = _augment_pos(pad_m(pos_keypoints))       # (B, m_pad, 5)
    pos_ds_aug = _augment_pos(pad_m(pos_descriptors))     # (B, m_pad, C+2)

    # Per-(seed, batch) salts, computed once on the host side of the graph (SMEM prefetch).
    seed_u = jnp.asarray(seed, dtype=jnp.int32).astype(jnp.uint32)
    batch_ids = (jnp.arange(B, dtype=jnp.uint32) + jnp.uint32(1)) * jnp.uint32(0x9E3779B9)
    salts = _hash_u32(batch_ids ^ seed_u).astype(jnp.int32)          # (B,) int32 bit pattern

    tm, tp = _choose_tiles(m_pad, B)
    n_i = m_pad // tm
    n_k = m_pad // tp

    kernel = functools.partial(
        _cgf_kernel,
        float(cgf_radius) * float(cgf_radius), float(triple_loss_gamma), m_pad, M)

    anc_map = lambda b, i, k, salt_ref: (b, 0, i)
    pos_map = lambda b, i, k, salt_ref: (b, k, 0)
    out_map = lambda b, i, k, salt_ref: (b, 0, i)

    kc = 5 + (C + 2)
    flops = 2 * B * m_pad * m_pad * kc + 60 * B * m_pad * m_pad
    # anc arrays are fetched once, pos arrays once per anchor tile, outputs written once.
    bytes_accessed = 4 * B * m_pad * (kc * (1 + n_i) + 2)

    bcl, mask_bm = pl.pallas_call(
        kernel,
        out_shape=(jax.ShapeDtypeStruct((B, 1, m_pad), jnp.float32),
                   jax.ShapeDtypeStruct((B, 1, m_pad), jnp.float32)),
        grid_spec=pltpu.PrefetchScalarGridSpec(
            num_scalar_prefetch=1,
            grid=(B, n_i, n_k),
            in_specs=[
                pl.BlockSpec((1, 5, tm), anc_map),
                pl.BlockSpec((1, C + 2, tm), anc_map),
                pl.BlockSpec((1, tp, 5), pos_map),
                pl.BlockSpec((1, tp, C + 2), pos_map),
            ],
            out_specs=(
                pl.BlockSpec((1, 1, tm), out_map),
                pl.BlockSpec((1, 1, tm), out_map),
            ),
            scratch_shapes=[
                pltpu.VMEM((1, tm), jnp.float32),   # running max random key (inside support)
                pltpu.VMEM((1, tm), jnp.float32),   # ds^2 at that key
                pltpu.VMEM((1, tm), jnp.float32),   # running min augmented kp^2
                pltpu.VMEM((1, tm), jnp.float32),   # ds^2 at that min
                pltpu.VMEM((1, tm), jnp.float32),   # running max random key (outside support)
                pltpu.VMEM((1, tm), jnp.float32),   # ds^2 at that key
            ]),
        compiler_params=pltpu.CompilerParams(
            dimension_semantics=("parallel", "parallel", "arbitrary")),
        cost_estimate=pl.CostEstimate(flops=flops, transcendentals=3 * B * m_pad,
                                      bytes_accessed=bytes_accessed),
    )(salts, anc_kp_aug, anc_ds_aug, pos_kp_aug, pos_ds_aug)

    return bcl[:, 0, :M], mask_bm[:, 0, :M]


def desc_cgf_loss(anc_keypoints, anc_descriptors, pos_keypoints, pos_descriptors,
                  anc_sigmas, seed=0, *, cgf_radius, triple_loss_gamma, sigma_max):
    """Forward of DescCGFLoss. Returns (loss (B, M), active_percentage (B,))."""
    B, _, M = anc_keypoints.shape
    before_clamp, mask_bm = _cgf_pairwise_core(
        anc_keypoints, anc_descriptors, pos_keypoints, pos_descriptors,
        seed, cgf_radius, triple_loss_gamma)

    num_pos = jnp.sum(mask_bm, axis=1)                                    # (B,)
    scaling = lax.stop_gradient(float(M) / (num_pos + 1.0))               # (B,)
    active_percentage = (jnp.sum((before_clamp > 1e-5).astype(jnp.float32), axis=1)
                         / (num_pos + 1.0))

    anc_weights = jnp.maximum(float(sigma_max) - anc_sigmas.astype(jnp.float32), 0.0)
    anc_weights_mean = jnp.mean(anc_weights, axis=1, keepdims=True)
    anc_weights = lax.stop_gradient(anc_weights / anc_weights_mean)

    loss = anc_weights * jnp.maximum(before_clamp, 0.0) * scaling[:, None]
    return loss, active_percentage


if __name__ == "__main__":
    B, C, M = 2, 32, 128
    CGF_RADIUS = 0.5
    TRIPLE_LOSS_GAMMA = 0.2
    SIGMA_MAX = 3.0

    key = jax.random.PRNGKey(0)
    k1, k2, k3, k4, k5 = jax.random.split(key, 5)
    anc_kp = jax.random.normal(k1, (B, 3, M), dtype=jnp.float32)
    pos_kp = jax.random.normal(k2, (B, 3, M), dtype=jnp.float32)
    anc_ds = jax.random.normal(k3, (B, C, M), dtype=jnp.float32)
    pos_ds = jax.random.normal(k4, (B, C, M), dtype=jnp.float32)
    anc_sigmas = jax.random.uniform(k5, (B, M), jnp.float32, 0.5, 1.5)

    fwd = jax.jit(functools.partial(desc_cgf_loss,
                                    cgf_radius=CGF_RADIUS,
                                    triple_loss_gamma=TRIPLE_LOSS_GAMMA,
                                    sigma_max=SIGMA_MAX))
    loss, active = fwd(anc_kp, anc_ds, pos_kp, pos_ds, anc_sigmas, 0)
    jax.block_until_ready((loss, active))
    assert loss.shape == (B, M) and active.shape == (B,)
    assert bool(jnp.all(jnp.isfinite(loss))) and bool(jnp.all(jnp.isfinite(active)))
    assert bool(jnp.all(loss >= 0.0))
    assert bool(jnp.all((active >= 0.0) & (active < 1.0)))

    # Deterministic pieces of the kernel vs. a pure-JAX reference.
    bcl, mask_bm = _cgf_pairwise_core(anc_kp, anc_ds, pos_kp, pos_ds, 0,
                                      CGF_RADIUS, TRIPLE_LOSS_GAMMA)
    ref_kp_diff = jnp.linalg.norm(anc_kp[:, :, :, None] - pos_kp[:, :, None, :], axis=1)
    mask_strict = jnp.any(ref_kp_diff <= CGF_RADIUS - 1e-3, axis=2)   # clearly inside
    mask_loose = jnp.any(ref_kp_diff <= CGF_RADIUS + 1e-3, axis=2)    # not clearly outside
    kernel_mask = mask_bm > 0.5
    assert bool(jnp.all(jnp.where(mask_strict, kernel_mask, True)))
    assert bool(jnp.all(jnp.where(kernel_mask, mask_loose, True)))
    # Anchors with no positive neighbour contribute exactly zero loss.
    assert bool(jnp.all(jnp.where(kernel_mask, True, bcl == 0.0)))
    assert bool(jnp.all(jnp.where(kernel_mask, True, loss == 0.0)))

    # Same seed -> identical result (stateless counter-based hashing).
    loss2, active2 = fwd(anc_kp, anc_ds, pos_kp, pos_ds, anc_sigmas, 0)
    assert bool(jnp.all(loss == loss2)) and bool(jnp.all(active == active2))

    # Degenerate radius: no positive pairs -> zero loss, zero active percentage.
    loss0, active0 = desc_cgf_loss(anc_kp, anc_ds, pos_kp, pos_ds, anc_sigmas, 0,
                                   cgf_radius=0.0,
                                   triple_loss_gamma=TRIPLE_LOSS_GAMMA,
                                   sigma_max=SIGMA_MAX)
    jax.block_until_ready((loss0, active0))
    assert bool(jnp.all(loss0 == 0.0)) and bool(jnp.all(active0 == 0.0))

    # Non-128-multiple M exercises the padded-tail path (valid-row masking in the kernel).
    Mp, Cp = 100, 16
    kp1, kp2, kp3, kp4, kp5 = jax.random.split(jax.random.PRNGKey(1), 5)
    loss_p, active_p = desc_cgf_loss(
        jax.random.normal(kp1, (1, 3, Mp), jnp.float32),
        jax.random.normal(kp3, (1, Cp, Mp), jnp.float32),
        jax.random.normal(kp2, (1, 3, Mp), jnp.float32),
        jax.random.normal(kp4, (1, Cp, Mp), jnp.float32),
        jax.random.uniform(kp5, (1, Mp), jnp.float32, 0.5, 1.5),
        7, cgf_radius=CGF_RADIUS, triple_loss_gamma=TRIPLE_LOSS_GAMMA, sigma_max=SIGMA_MAX)
    jax.block_until_ready((loss_p, active_p))
    assert loss_p.shape == (1, Mp) and active_p.shape == (1,)
    assert bool(jnp.all(jnp.isfinite(loss_p))) and bool(jnp.all(loss_p >= 0.0))

    print("KERNEL_OK")
</pallas_src>

<mosaic_0001>
module attributes {stable_mosaic.version = 11 : i64} {
  func.func @_cgf_kernel(%arg0: i32, %arg1: i32, %arg2: i32, %arg3: memref<2xi32, #tpu.memory_space<smem>>, %arg4: memref<1x5x128xf32, #tpu.memory_space<vmem>>, %arg5: memref<1x34x128xf32, #tpu.memory_space<vmem>>, %arg6: memref<1x128x5xf32, #tpu.memory_space<vmem>>, %arg7: memref<1x128x34xf32, #tpu.memory_space<vmem>>, %arg8: memref<1x1x128xf32, #tpu.memory_space<vmem>>, %arg9: memref<1x1x128xf32, #tpu.memory_space<vmem>>, %arg10: memref<1x128xf32, #tpu.memory_space<vmem>>, %arg11: memref<1x128xf32, #tpu.memory_space<vmem>>, %arg12: memref<1x128xf32, #tpu.memory_space<vmem>>, %arg13: memref<1x128xf32, #tpu.memory_space<vmem>>, %arg14: memref<1x128xf32, #tpu.memory_space<vmem>>, %arg15: memref<1x128xf32, #tpu.memory_space<vmem>>) attributes {dimension_semantics = [#tpu.dimension_semantics<parallel>, #tpu.dimension_semantics<parallel>, #tpu.dimension_semantics<arbitrary>], iteration_bounds = array<i64: 2, 1, 1>, scalar_prefetch = 1 : i64, scratch_operands = 6 : i64, tpu.core_type = #tpu.core_type<tc>, window_params = [{transform_indices = @transform_0, window_bounds = array<i64: 1, 5, 128>}, {transform_indices = @transform_1, window_bounds = array<i64: 1, 34, 128>}, {transform_indices = @transform_2, window_bounds = array<i64: 1, 128, 5>}, {transform_indices = @transform_3, window_bounds = array<i64: 1, 128, 34>}, {transform_indices = @transform_4, window_bounds = array<i64: 1, 1, 128>}, {transform_indices = @transform_5, window_bounds = array<i64: 1, 1, 128>}]} {
    %c0 = arith.constant 0 : index
    %c0_0 = arith.constant 0 : index
    %c0_1 = arith.constant 0 : index
    %0 = vector.load %arg4[%c0, %c0_0, %c0_1] : memref<1x5x128xf32, #tpu.memory_space<vmem>>, vector<1x5x128xf32>
    %1 = vector.shape_cast %0 : vector<1x5x128xf32> to vector<5x128xf32>
    %c0_2 = arith.constant 0 : index
    %c0_3 = arith.constant 0 : index
    %c0_4 = arith.constant 0 : index
    %2 = vector.load %arg5[%c0_2, %c0_3, %c0_4] : memref<1x34x128xf32, #tpu.memory_space<vmem>>, vector<1x34x128xf32>
    %3 = vector.shape_cast %2 : vector<1x34x128xf32> to vector<34x128xf32>
    %c0_5 = arith.constant 0 : index
    %c0_6 = arith.constant 0 : index
    %c0_7 = arith.constant 0 : index
    %4 = vector.load %arg6[%c0_5, %c0_6, %c0_7] : memref<1x128x5xf32, #tpu.memory_space<vmem>>, vector<1x128x5xf32>
    %5 = vector.shape_cast %4 : vector<1x128x5xf32> to vector<128x5xf32>
    %c0_8 = arith.constant 0 : index
    %c0_9 = arith.constant 0 : index
    %c0_10 = arith.constant 0 : index
    %6 = vector.load %arg7[%c0_8, %c0_9, %c0_10] : memref<1x128x34xf32, #tpu.memory_space<vmem>>, vector<1x128x34xf32>
    %7 = vector.shape_cast %6 : vector<1x128x34xf32> to vector<128x34xf32>
    %cst = arith.constant dense<0.000000e+00> : vector<128x128xf32>
    %8 = tpu.matmul %5, %1, %cst {dimension_numbers = #tpu.dot_dimension_numbers<[1], [0], [0], [1], [0, 0, 1, 1], [], []>} : vector<128x5xf32>, vector<5x128xf32>, vector<128x128xf32> -> vector<128x128xf32>
    %cst_11 = arith.constant 0.000000e+00 : f32
    %9 = vector.broadcast %cst_11 : f32 to vector<128x128xf32>
    %10 = arith.maximumf %8, %9 : vector<128x128xf32>
    %cst_12 = arith.constant dense<0.000000e+00> : vector<128x128xf32>
    %11 = tpu.matmul %7, %3, %cst_12 {dimension_numbers = #tpu.dot_dimension_numbers<[1], [0], [0], [1], [0, 0, 1, 1], [], []>} : vector<128x34xf32>, vector<34x128xf32>, vector<128x128xf32> -> vector<128x128xf32>
    %cst_13 = arith.constant 0.000000e+00 : f32
    %12 = vector.broadcast %cst_13 : f32 to vector<128x128xf32>
    %13 = arith.maximumf %11, %12 : vector<128x128xf32>
    %14 = tpu.iota {dimensions = array<i32: 0>} : vector<128x128xi32>
    %15 = tpu.iota {dimensions = array<i32: 1>} : vector<128x128xi32>
    %c128_i32 = arith.constant 128 : i32
    %16 = arith.muli %arg2, %c128_i32 : i32
    %c128_i32_14 = arith.constant 128 : i32
    %17 = arith.muli %16, %c128_i32_14 : i32
    %c128_i32_15 = arith.constant 128 : i32
    %18 = arith.muli %arg1, %c128_i32_15 : i32
    %19 = arith.addi %17, %18 : i32
    %20 = arith.index_cast %arg0 : i32 to index
    %21 = memref.load %arg3[%20] : memref<2xi32, #tpu.memory_space<smem>>
    %c128_i32_16 = arith.constant 128 : i32
    %22 = vector.broadcast %c128_i32_16 : i32 to vector<128x128xi32>
    %23 = arith.muli %14, %22 : vector<128x128xi32>
    %24 = arith.addi %23, %15 : vector<128x128xi32>
    %25 = vector.broadcast %19 : i32 to vector<128x128xi32>
    %26 = arith.addi %24, %25 : vector<128x128xi32>
    %27 = vector.broadcast %21 : i32 to vector<128x128xi32>
    %28 = arith.xori %26, %27 : vector<128x128xi32>
    %c16_i32 = arith.constant 16 : i32
    %29 = vector.broadcast %c16_i32 : i32 to vector<128x128xi32>
    %30 = arith.shrui %28, %29 : vector<128x128xi32>
    %31 = arith.xori %28, %30 : vector<128x128xi32>
    %c-2048144789_i32 = arith.constant -2048144789 : i32
    %32 = vector.broadcast %c-2048144789_i32 : i32 to vector<128x128xi32>
    %33 = arith.muli %31, %32 : vector<128x128xi32>
    %c13_i32 = arith.constant 13 : i32
    %34 = vector.broadcast %c13_i32 : i32 to vector<128x128xi32>
    %35 = arith.shrui %33, %34 : vector<128x128xi32>
    %36 = arith.xori %33, %35 : vector<128x128xi32>
    %c-1028477387_i32 = arith.constant -1028477387 : i32
    %37 = vector.broadcast %c-1028477387_i32 : i32 to vector<128x128xi32>
    %38 = arith.muli %36, %37 : vector<128x128xi32>
    %c16_i32_17 = arith.constant 16 : i32
    %39 = vector.broadcast %c16_i32_17 : i32 to vector<128x128xi32>
    %40 = arith.shrui %38, %39 : vector<128x128xi32>
    %41 = arith.xori %38, %40 : vector<128x128xi32>
    %c16777215_i32 = arith.constant 16777215 : i32
    %42 = vector.broadcast %c16777215_i32 : i32 to vector<128x128xi32>
    %43 = arith.andi %41, %42 : vector<128x128xi32>
    %44 = arith.sitofp %43 : vector<128x128xi32> to vector<128x128xf32>
    %cst_18 = arith.constant 2.500000e-01 : f32
    %45 = vector.broadcast %cst_18 : f32 to vector<128x128xf32>
    %46 = arith.cmpf ole, %10, %45 : vector<128x128xf32>
    %cst_19 = arith.constant dense<true> : vector<128x128xi1>
    %47 = arith.xori %46, %cst_19 : vector<128x128xi1>
    %cst_20 = arith.constant 1.000000e+08 : f32
    %48 = vector.broadcast %cst_20 : f32 to vector<128x128xf32>
    %49 = arith.addf %10, %48 : vector<128x128xf32>
    %50 = arith.select %46, %49, %10 : vector<128x128xi1>, vector<128x128xf32>
    %c0_i32 = arith.constant 0 : i32
    %51 = arith.cmpi eq, %arg2, %c0_i32 : i32
    %52 = arith.extui %51 : i1 to i32
    %c0_i32_21 = arith.constant 0 : i32
    %53 = arith.cmpi ne, %52, %c0_i32_21 : i32
    scf.if %53 {
      %cst_65 = arith.constant -1.000000e+00 : f32
      %109 = vector.broadcast %cst_65 : f32 to vector<1x128xf32>
      %c0_66 = arith.constant 0 : index
      %c0_67 = arith.constant 0 : index
      %110 = vector.load %arg10[%c0_66, %c0_67] : memref<1x128xf32, #tpu.memory_space<vmem>>, vector<1x128xf32>
      tpu.vector_store %arg10[%c0_66, %c0_67], %109 {strides = array<i32>} : memref<1x128xf32, #tpu.memory_space<vmem>>, vector<1x128xf32>,
      %cst_68 = arith.constant 0.000000e+00 : f32
      %111 = vector.broadcast %cst_68 : f32 to vector<1x128xf32>
      %c0_69 = arith.constant 0 : index
      %c0_70 = arith.constant 0 : index
      %112 = vector.load %arg11[%c0_69, %c0_70] : memref<1x128xf32, #tpu.memory_space<vmem>>, vector<1x128xf32>
      tpu.vector_store %arg11[%c0_69, %c0_70], %111 {strides = array<i32>} : memref<1x128xf32, #tpu.memory_space<vmem>>, vector<1x128xf32>,
      %cst_71 = arith.constant 3.000000e+38 : f32
      %113 = vector.broadcast %cst_71 : f32 to vector<1x128xf32>
      %c0_72 = arith.constant 0 : index
      %c0_73 = arith.constant 0 : index
      %114 = vector.load %arg12[%c0_72, %c0_73] : memref<1x128xf32, #tpu.memory_space<vmem>>, vector<1x128xf32>
      tpu.vector_store %arg12[%c0_72, %c0_73], %113 {strides = array<i32>} : memref<1x128xf32, #tpu.memory_space<vmem>>, vector<1x128xf32>,
      %cst_74 = arith.constant 0.000000e+00 : f32
      %115 = vector.broadcast %cst_74 : f32 to vector<1x128xf32>
      %c0_75 = arith.constant 0 : index
      %c0_76 = arith.constant 0 : index
      %116 = vector.load %arg13[%c0_75, %c0_76] : memref<1x128xf32, #tpu.memory_space<vmem>>, vector<1x128xf32>
      tpu.vector_store %arg13[%c0_75, %c0_76], %115 {strides = array<i32>} : memref<1x128xf32, #tpu.memory_space<vmem>>, vector<1x128xf32>,
      %cst_77 = arith.constant -1.000000e+00 : f32
      %117 = vector.broadcast %cst_77 : f32 to vector<1x128xf32>
      %c0_78 = arith.constant 0 : index
      %c0_79 = arith.constant 0 : index
      %118 = vector.load %arg14[%c0_78, %c0_79] : memref<1x128xf32, #tpu.memory_space<vmem>>, vector<1x128xf32>
      tpu.vector_store %arg14[%c0_78, %c0_79], %117 {strides = array<i32>} : memref<1x128xf32, #tpu.memory_space<vmem>>, vector<1x128xf32>,
      %119 = vector.extract_strided_slice %13 {offsets = [0, 0], sizes = [1, 128], strides = [1, 1]} : vector<128x128xf32> to vector<1x128xf32>
      %c0_80 = arith.constant 0 : index
      %c0_81 = arith.constant 0 : index
      %120 = vector.load %arg15[%c0_80, %c0_81] : memref<1x128xf32, #tpu.memory_space<vmem>>, vector<1x128xf32>
      tpu.vector_store %arg15[%c0_80, %c0_81], %119 {strides = array<i32>} : memref<1x128xf32, #tpu.memory_space<vmem>>, vector<1x128xf32>,
    } else {
    }
    %cst_22 = arith.constant -1.000000e+00 : f32
    %54 = vector.broadcast %cst_22 : f32 to vector<128x128xf32>
    %55 = arith.select %46, %44, %54 : vector<128x128xi1>, vector<128x128xf32>
    %cst_23 = arith.constant dense<0xFF800000> : vector<128xf32>
    %56 = vector.multi_reduction <maximumf>, %55, %cst_23 [0] : vector<128x128xf32> to vector<128xf32>
    %57 = vector.shape_cast %56 : vector<128xf32> to vector<1x128xf32>
    %58 = vector.broadcast %57 : vector<1x128xf32> to vector<128x128xf32>
    %59 = arith.cmpf oeq, %55, %58 : vector<128x128xf32>
    %cst_24 = arith.constant -1.000000e+00 : f32
    %60 = vector.broadcast %cst_24 : f32 to vector<128x128xf32>
    %61 = arith.select %59, %13, %60 : vector<128x128xi1>, vector<128x128xf32>
    %cst_25 = arith.constant dense<0xFF800000> : vector<128xf32>
    %62 = vector.multi_reduction <maximumf>, %61, %cst_25 [0] : vector<128x128xf32> to vector<128xf32>
    %63 = vector.shape_cast %62 : vector<128xf32> to vector<1x128xf32>
    %c0_26 = arith.constant 0 : index
    %c0_27 = arith.constant 0 : index
    %64 = vector.load %arg10[%c0_26, %c0_27] : memref<1x128xf32, #tpu.memory_space<vmem>>, vector<1x128xf32>
    %65 = arith.cmpf ogt, %57, %64 : vector<1x128xf32>
    %c0_28 = arith.constant 0 : index
    %c0_29 = arith.constant 0 : index
    %66 = vector.load %arg11[%c0_28, %c0_29] : memref<1x128xf32, #tpu.memory_space<vmem>>, vector<1x128xf32>
    %67 = arith.select %65, %63, %66 : vector<1x128xi1>, vector<1x128xf32>
    %c0_30 = arith.constant 0 : index
    %c0_31 = arith.constant 0 : index
    %68 = vector.load %arg11[%c0_30, %c0_31] : memref<1x128xf32, #tpu.memory_space<vmem>>, vector<1x128xf32>
    tpu.vector_store %arg11[%c0_30, %c0_31], %67 {strides = array<i32>} : memref<1x128xf32, #tpu.memory_space<vmem>>, vector<1x128xf32>,
    %c0_32 = arith.constant 0 : index
    %c0_33 = arith.constant 0 : index
    %69 = vector.load %arg10[%c0_32, %c0_33] : memref<1x128xf32, #tpu.memory_space<vmem>>, vector<1x128xf32>
    %70 = arith.select %65, %57, %69 : vector<1x128xi1>, vector<1x128xf32>
    %c0_34 = arith.constant 0 : index
    %c0_35 = arith.constant 0 : index
    %71 = vector.load %arg10[%c0_34, %c0_35] : memref<1x128xf32, #tpu.memory_space<vmem>>, vector<1x128xf32>
    tpu.vector_store %arg10[%c0_34, %c0_35], %70 {strides = array<i32>} : memref<1x128xf32, #tpu.memory_space<vmem>>, vector<1x128xf32>,
    %cst_36 = arith.constant -1.000000e+00 : f32
    %72 = vector.broadcast %cst_36 : f32 to vector<128x128xf32>
    %73 = arith.select %47, %44, %72 : vector<128x128xi1>, vector<128x128xf32>
    %cst_37 = arith.constant dense<0xFF800000> : vector<128xf32>
    %74 = vector.multi_reduction <maximumf>, %73, %cst_37 [0] : vector<128x128xf32> to vector<128xf32>
    %75 = vector.shape_cast %74 : vector<128xf32> to vector<1x128xf32>
    %76 = vector.broadcast %75 : vector<1x128xf32> to vector<128x128xf32>
    %77 = arith.cmpf oeq, %73, %76 : vector<128x128xf32>
    %cst_38 = arith.constant -1.000000e+00 : f32
    %78 = vector.broadcast %cst_38 : f32 to vector<128x128xf32>
    %79 = arith.select %77, %13, %78 : vector<128x128xi1>, vector<128x128xf32>
    %cst_39 = arith.constant dense<0xFF800000> : vector<128xf32>
    %80 = vector.multi_reduction <maximumf>, %79, %cst_39 [0] : vector<128x128xf32> to vector<128xf32>
    %81 = vector.shape_cast %80 : vector<128xf32> to vector<1x128xf32>
    %c0_40 = arith.constant 0 : index
    %c0_41 = arith.constant 0 : index
    %82 = vector.load %arg14[%c0_40, %c0_41] : memref<1x128xf32, #tpu.memory_space<vmem>>, vector<1x128xf32>
    %83 = arith.cmpf ogt, %75, %82 : vector<1x128xf32>
    %c0_42 = arith.constant 0 : index
    %c0_43 = arith.constant 0 : index
    %84 = vector.load %arg15[%c0_42, %c0_43] : memref<1x128xf32, #tpu.memory_space<vmem>>, vector<1x128xf32>
    %85 = arith.select %83, %81, %84 : vector<1x128xi1>, vector<1x128xf32>
    %c0_44 = arith.constant 0 : index
    %c0_45 = arith.constant 0 : index
    %86 = vector.load %arg15[%c0_44, %c0_45] : memref<1x128xf32, #tpu.memory_space<vmem>>, vector<1x128xf32>
    tpu.vector_store %arg15[%c0_44, %c0_45], %85 {strides = array<i32>} : memref<1x128xf32, #tpu.memory_space<vmem>>, vector<1x128xf32>,
    %c0_46 = arith.constant 0 : index
    %c0_47 = arith.constant 0 : index
    %87 = vector.load %arg14[%c0_46, %c0_47] : memref<1x128xf32, #tpu.memory_space<vmem>>, vector<1x128xf32>
    %88 = arith.select %83, %75, %87 : vector<1x128xi1>, vector<1x128xf32>
    %c0_48 = arith.constant 0 : index
    %c0_49 = arith.constant 0 : index
    %89 = vector.load %arg14[%c0_48, %c0_49] : memref<1x128xf32, #tpu.memory_space<vmem>>, vector<1x128xf32>
    tpu.vector_store %arg14[%c0_48, %c0_49], %88 {strides = array<i32>} : memref<1x128xf32, #tpu.memory_space<vmem>>, vector<1x128xf32>,
    %cst_50 = arith.constant dense<0x7F800000> : vector<128xf32>
    %90 = vector.multi_reduction <minimumf>, %50, %cst_50 [0] : vector<128x128xf32> to vector<128xf32>
    %91 = vector.shape_cast %90 : vector<128xf32> to vector<1x128xf32>
    %92 = vector.broadcast %91 : vector<1x128xf32> to vector<128x128xf32>
    %93 = arith.cmpf oeq, %50, %92 : vector<128x128xf32>
    %cst_51 = arith.constant -1.000000e+00 : f32
    %94 = vector.broadcast %cst_51 : f32 to vector<128x128xf32>
    %95 = arith.select %93, %13, %94 : vector<128x128xi1>, vector<128x128xf32>
    %cst_52 = arith.constant dense<0xFF800000> : vector<128xf32>
    %96 = vector.multi_reduction <maximumf>, %95, %cst_52 [0] : vector<128x128xf32> to vector<128xf32>
    %97 = vector.shape_cast %96 : vector<128xf32> to vector<1x128xf32>
    %c0_53 = arith.constant 0 : index
    %c0_54 = arith.constant 0 : index
    %98 = vector.load %arg12[%c0_53, %c0_54] : memref<1x128xf32, #tpu.memory_space<vmem>>, vector<1x128xf32>
    %99 = arith.cmpf olt, %91, %98 : vector<1x128xf32>
    %c0_55 = arith.constant 0 : index
    %c0_56 = arith.constant 0 : index
    %100 = vector.load %arg13[%c0_55, %c0_56] : memref<1x128xf32, #tpu.memory_space<vmem>>, vector<1x128xf32>
    %101 = arith.select %99, %97, %100 : vector<1x128xi1>, vector<1x128xf32>
    %c0_57 = arith.constant 0 : index
    %c0_58 = arith.constant 0 : index
    %102 = vector.load %arg13[%c0_57, %c0_58] : memref<1x128xf32, #tpu.memory_space<vmem>>, vector<1x128xf32>
    tpu.vector_store %arg13[%c0_57, %c0_58], %101 {strides = array<i32>} : memref<1x128xf32, #tpu.memory_space<vmem>>, vector<1x128xf32>,
    %c0_59 = arith.constant 0 : index
    %c0_60 = arith.constant 0 : index
    %103 = vector.load %arg12[%c0_59, %c0_60] : memref<1x128xf32, #tpu.memory_space<vmem>>, vector<1x128xf32>
    %104 = arith.select %99, %91, %103 : vector<1x128xi1>, vector<1x128xf32>
    %c0_61 = arith.constant 0 : index
    %c0_62 = arith.constant 0 : index
    %105 = vector.load %arg12[%c0_61, %c0_62] : memref<1x128xf32, #tpu.memory_space<vmem>>, vector<1x128xf32>
    tpu.vector_store %arg12[%c0_61, %c0_62], %104 {strides = array<i32>} : memref<1x128xf32, #tpu.memory_space<vmem>>, vector<1x128xf32>,
    %c0_i32_63 = arith.constant 0 : i32
    %106 = arith.cmpi eq, %arg2, %c0_i32_63 : i32
    %107 = arith.extui %106 : i1 to i32
    %c0_i32_64 = arith.constant 0 : i32
    %108 = arith.cmpi ne, %107, %c0_i32_64 : i32
    scf.if %108 {
      %c0_65 = arith.constant 0 : index
      %c0_66 = arith.constant 0 : index
      %109 = vector.load %arg10[%c0_65, %c0_66] : memref<1x128xf32, #tpu.memory_space<vmem>>, vector<1x128xf32>
      %cst_67 = arith.constant 0.000000e+00 : f32
      %110 = vector.broadcast %cst_67 : f32 to vector<1x128xf32>
      %111 = arith.cmpf oge, %109, %110 : vector<1x128xf32>
      %112 = arith.extui %111 : vector<1x128xi1> to vector<1x128xi32>
      %113 = arith.sitofp %112 : vector<1x128xi32> to vector<1x128xf32>
      %c0_68 = arith.constant 0 : index
      %c0_69 = arith.constant 0 : index
      %114 = vector.load %arg11[%c0_68, %c0_69] : memref<1x128xf32, #tpu.memory_space<vmem>>, vector<1x128xf32>
      %115 = math.sqrt %114 : vector<1x128xf32>
      %c0_70 = arith.constant 0 : index
      %c0_71 = arith.constant 0 : index
      %116 = vector.load %arg13[%c0_70, %c0_71] : memref<1x128xf32, #tpu.memory_space<vmem>>, vector<1x128xf32>
      %117 = math.sqrt %116 : vector<1x128xf32>
      %c0_72 = arith.constant 0 : index
      %c0_73 = arith.constant 0 : index
      %118 = vector.load %arg15[%c0_72, %c0_73] : memref<1x128xf32, #tpu.memory_space<vmem>>, vector<1x128xf32>
      %119 = math.sqrt %118 : vector<1x128xf32>
      %120 = tpu.iota {dimensions = array<i32: 1>} : vector<1x128xi32>
      %c128_i32_74 = arith.constant 128 : i32
      %121 = arith.muli %arg1, %c128_i32_74 : i32
      %122 = vector.broadcast %121 : i32 to vector<1x128xi32>
      %123 = arith.addi %120, %122 : vector<1x128xi32>
      %124 = vector.broadcast %21 : i32 to vector<1x128xi32>
      %125 = arith.xori %123, %124 : vector<1x128xi32>
      %c-1525552717_i32 = arith.constant -1525552717 : i32
      %126 = vector.broadcast %c-1525552717_i32 : i32 to vector<1x128xi32>
      %127 = arith.xori %125, %126 : vector<1x128xi32>
      %c16_i32_75 = arith.constant 16 : i32
      %128 = vector.broadcast %c16_i32_75 : i32 to vector<1x128xi32>
      %129 = arith.shrui %127, %128 : vector<1x128xi32>
      %130 = arith.xori %127, %129 : vector<1x128xi32>
      %c-2048144789_i32_76 = arith.constant -2048144789 : i32
      %131 = vector.broadcast %c-2048144789_i32_76 : i32 to vector<1x128xi32>
      %132 = arith.muli %130, %131 : vector<1x128xi32>
      %c13_i32_77 = arith.constant 13 : i32
      %133 = vector.broadcast %c13_i32_77 : i32 to vector<1x128xi32>
      %134 = arith.shrui %132, %133 : vector<1x128xi32>
      %135 = arith.xori %132, %134 : vector<1x128xi32>
      %c-1028477387_i32_78 = arith.constant -1028477387 : i32
      %136 = vector.broadcast %c-1028477387_i32_78 : i32 to vector<1x128xi32>
      %137 = arith.muli %135, %136 : vector<1x128xi32>
      %c16_i32_79 = arith.constant 16 : i32
      %138 = vector.broadcast %c16_i32_79 : i32 to vector<1x128xi32>
      %139 = arith.shrui %137, %138 : vector<1x128xi32>
      %140 = arith.xori %137, %139 : vector<1x128xi32>
      %c1_i32 = arith.constant 1 : i32
      %141 = vector.broadcast %c1_i32 : i32 to vector<1x128xi32>
      %142 = arith.andi %140, %141 : vector<1x128xi32>
      %c0_i32_80 = arith.constant 0 : i32
      %143 = vector.broadcast %c0_i32_80 : i32 to vector<1x128xi32>
      %144 = arith.cmpi eq, %142, %143 : vector<1x128xi32>
      %145 = arith.select %144, %117, %119 : vector<1x128xi1>, vector<1x128xf32>
      %146 = arith.subf %115, %145 : vector<1x128xf32>
      %cst_81 = arith.constant 2.000000e-01 : f32
      %147 = vector.broadcast %cst_81 : f32 to vector<1x128xf32>
      %148 = arith.addf %146, %147 : vector<1x128xf32>
      %149 = arith.mulf %148, %113 : vector<1x128xf32>
      %c0_82 = arith.constant 0 : index
      %c0_83 = arith.constant 0 : index
      %c0_84 = arith.constant 0 : index
      %150 = vector.load %arg8[%c0_82, %c0_83, %c0_84] : memref<1x1x128xf32, #tpu.memory_space<vmem>>, vector<1x1x128xf32>
      %151 = vector.shape_cast %150 : vector<1x1x128xf32> to vector<1x128xf32>
      %152 = vector.shape_cast %149 : vector<1x128xf32> to vector<1x1x128xf32>
      tpu.vector_store %arg8[%c0_82, %c0_83, %c0_84], %152 {strides = array<i32>} : memref<1x1x128xf32, #tpu.memory_space<vmem>>, vector<1x1x128xf32>,
      %c0_85 = arith.constant 0 : index
      %c0_86 = arith.constant 0 : index
      %c0_87 = arith.constant 0 : index
      %153 = vector.load %arg9[%c0_85, %c0_86, %c0_87] : memref<1x1x128xf32, #tpu.memory_space<vmem>>, vector<1x1x128xf32>
      %154 = vector.shape_cast %153 : vector<1x1x128xf32> to vector<1x128xf32>
      %155 = vector.shape_cast %113 : vector<1x128xf32> to vector<1x1x128xf32>
      tpu.vector_store %arg9[%c0_85, %c0_86, %c0_87], %155 {strides = array<i32>} : memref<1x1x128xf32, #tpu.memory_space<vmem>>, vector<1x1x128xf32>,
    } else {
    }
    return
  }
  func.func @transform_0(%arg0: i32, %arg1: i32, %arg2: i32, %arg3: memref<2xi32, #tpu.memory_space<smem>>) -> (i32, i32, i32) {
    %c0_i32 = arith.constant 0 : i32
    %c0_i32_0 = arith.constant 0 : i32
    return %arg0, %c0_i32, %arg1 : i32, i32, i32
  }
  func.func @transform_1(%arg0: i32, %arg1: i32, %arg2: i32, %arg3: memref<2xi32, #tpu.memory_space<smem>>) -> (i32, i32, i32) {
    %c0_i32 = arith.constant 0 : i32
    %c0_i32_0 = arith.constant 0 : i32
    return %arg0, %c0_i32, %arg1 : i32, i32, i32
  }
  func.func @transform_2(%arg0: i32, %arg1: i32, %arg2: i32, %arg3: memref<2xi32, #tpu.memory_space<smem>>) -> (i32, i32, i32) {
    %c0_i32 = arith.constant 0 : i32
    %c0_i32_0 = arith.constant 0 : i32
    return %arg0, %arg2, %c0_i32 : i32, i32, i32
  }
  func.func @transform_3(%arg0: i32, %arg1: i32, %arg2: i32, %arg3: memref<2xi32, #tpu.memory_space<smem>>) -> (i32, i32, i32) {
    %c0_i32 = arith.constant 0 : i32
    %c0_i32_0 = arith.constant 0 : i32
    return %arg0, %arg2, %c0_i32 : i32, i32, i32
  }
  func.func @transform_4(%arg0: i32, %arg1: i32, %arg2: i32, %arg3: memref<2xi32, #tpu.memory_space<smem>>) -> (i32, i32, i32) {
    %c0_i32 = arith.constant 0 : i32
    %c0_i32_0 = arith.constant 0 : i32
    return %arg0, %c0_i32, %arg1 : i32, i32, i32
  }
  func.func @transform_5(%arg0: i32, %arg1: i32, %arg2: i32, %arg3: memref<2xi32, #tpu.memory_space<smem>>) -> (i32, i32, i32) {
    %c0_i32 = arith.constant 0 : i32
    %c0_i32_0 = arith.constant 0 : i32
    return %arg0, %c0_i32, %arg1 : i32, i32, i32
  }
}

</mosaic_0001>

<llo_original>
// kernel: desc_cgf_loss.1
$region0: #{desc_cgf_loss.1}
  #allocation0 [shape = 'u32[]', space=smem, size = 0x4, offset = 0x4, fixed_abs, tag = 'smem constant byte address 0x4 - core index']
  #allocation1 [shape = 'u32[144,128]{1,0:T(1,128)}', space=vmem, size = 0x12000, scoped, tag = 'internal scratch']
  #allocation2 [shape = 'f32[1,128]{1,0:T(1,128)}', space=vmem, size = 0x200, scoped, tag = 'scratch operand']
  #allocation3 [shape = 'f32[1,128]{1,0:T(1,128)}', space=vmem, size = 0x200, scoped, tag = 'scratch operand']
  #allocation4 [shape = 'f32[1,128]{1,0:T(1,128)}', space=vmem, size = 0x200, scoped, tag = 'scratch operand']
  #allocation5 [shape = 'f32[1,128]{1,0:T(1,128)}', space=vmem, size = 0x200, scoped, tag = 'scratch operand']
  #allocation6 [shape = 'f32[1,128]{1,0:T(1,128)}', space=vmem, size = 0x200, scoped, tag = 'scratch operand']
  #allocation7 [shape = 'f32[1,128]{1,0:T(1,128)}', space=vmem, size = 0x200, scoped, tag = 'scratch operand']
  #allocation8 [shape = 's32[1]{0}', space=sflag, size = 0x4, scoped, tag = 'scoped memory for desc_cgf_loss.1']
  #allocation9 [shape = 'u8[512]{0}', space=smem, size = 0x200, scoped, tag = 'prefetched SMEM operand 0']
  %s0 = inlined_call_operand.vmem [shape: s32[2], index: 0, kind: input, shape index: {}]
  %s1 = inlined_call_operand.vmem [shape: f32[2,5,128], index: 1, kind: input, shape index: {}]
  %s2 = inlined_call_operand.vmem [shape: f32[2,34,128], index: 2, kind: input, shape index: {}]
  %s3 = inlined_call_operand.vmem [shape: f32[2,128,5], index: 3, kind: input, shape index: {}]
  %s4 = inlined_call_operand.vmem [shape: f32[2,128,34], index: 4, kind: input, shape index: {}]
  %s5 = inlined_call_operand.vmem [shape: f32[2,1,128], index: 5, kind: output, shape index: {0}]
  %s6 = inlined_call_operand.vmem [shape: f32[2,1,128], index: 6, kind: output, shape index: {1}]
  %7 = xla_tuple %s5, %s6
  %s8 = sld [smem:[#allocation0]]
  $region65: #{desc_cgf_loss.1} parent=0
    _
  %s10 = ssub.s32 1, %s8
  %s11 = scalar_select 0, %s10, %s8
  %s12 = sshll.u32 %s0, 4
  %s13 = int_to_ptr.vmem [resolvable:$true] %s12
  %15 = dma.vmem_to_smem %s13, 16, [#allocation9], [#allocation8]
  %16 = dma.done [#allocation8], 16
  %17 = sfence
  loop: start=0, step=1, limit=4
  $region2: #{desc_cgf_loss.1} parent=0 // loop_pre_header
    _
  $region3: #{desc_cgf_loss.1} parent=0 // loop_header
    %s19 = sphi 0, %s23
    %p20 = scmp.ge.s32.totalorder %s19, 4
    %s26 = sphi 0, %s45
    %s27 = sphi 0, %s41
    %s28 = sphi 0, %s37
    %s29 = sphi 0, %s26
    %s30 = sphi 0, %s27
    %s31 = sphi 0, %s28
    %s32 = sphi 0, %s29
    %s33 = sphi 0, %s30
    %s34 = sphi 0, %s31
    %s50 = sphi 0, %s52
    %s53 = sphi 0, %s50
    %s54 = sphi 0, %s53
    %s70 = sphi 0, %s54
    %s78 = sphi 0, %s80
    %s81 = sphi 0, %s78
    %s82 = sphi 0, %s81
    %s98 = sphi 0, %s82
    %s106 = sphi 0, %s108
    %s109 = sphi 0, %s106
    %s110 = sphi 0, %s109
    %s126 = sphi 0, %s110
    %s134 = sphi 0, %s136
    %s137 = sphi 0, %s134
    %s138 = sphi 0, %s137
    %s154 = sphi 0, %s138
    %s162 = sphi 0, %s164
    %s165 = sphi 0, %s162
    %s166 = sphi 0, %s165
    %s182 = sphi 0, %s166
    %s190 = sphi 0, %s192
    %s193 = sphi 0, %s190
    %s194 = sphi 0, %s193
    %s210 = sphi 0, %s194
  $region4: #{desc_cgf_loss.1} parent=0 // loop_header_branch
    %22 = sbr.rel (%p20) target = $region8
  $region5: #{desc_cgf_loss.1} parent=0 // loop_body
    %s24 = ssub.s32 %s19, 1
    %s25 = ssub.s32 %s19, 2
    %s35 = sadd.s32 1, %s28
    %p36 = scmp.ge.s32.totalorder %s35, 1
    %s37 = scalar_select %p36, 0, %s35
    %s38 = sadd.s32 1, %s27
    %s39 = scalar_select %p36, %s38, %s27
    %p40 = scmp.ge.s32.totalorder %s39, 1
    %s41 = scalar_select %p40, 0, %s39
    %s42 = sadd.s32 1, %s26
    %s43 = scalar_select %p40, %s42, %s26
    %p44 = scmp.ge.s32.totalorder %s43, 2
    %s45 = scalar_select %p44, 0, %s43
    %s46 = ssub.s32 %s26, %s45
    %s47 = ssub.s32 %s27, %s41
    %s48 = sor.u32 %s46, %s47
    %p49 = scmp.eq.s32.totalorder %s48, 0
    %s51 = sadd.s32 %s50, 1
    %s52 = scalar_select %p49, %s50, %s51
    %p55 = pneg %p49
    %p56 = scmp.eq.s32.totalorder %s19, 1
    %p57 = por %p55, %p56
    %p58 = scmp.ne.s32.totalorder %s50, %s53
    %p59 = scmp.eq.s32.totalorder %s19, 0
    %p60 = por %p58, %p59
    %p61 = scmp.ne.s32.totalorder %s50, %s53
    %p62 = scmp.eq.s32.totalorder %s24, 1
    %p63 = por %p61, %p62
    %p64 = scmp.ne.s32.totalorder %s53, %s54
    %p65 = scmp.eq.s32.totalorder %s24, 0
    %p66 = por %p64, %p65
    %p67 = scmp.ne.s32.totalorder %s53, %s54
    %p68 = scmp.eq.s32.totalorder %s25, 1
    %p69 = por %p67, %p68
    %p71 = scmp.ne.s32.totalorder %s54, %s70
    %p72 = scmp.eq.s32.totalorder %s25, 0
    %p73 = por %p71, %p72
    %s74 = ssub.s32 %s26, %s45
    %s75 = ssub.s32 %s27, %s41
    %s76 = sor.u32 %s74, %s75
    %p77 = scmp.eq.s32.totalorder %s76, 0
    %s79 = sadd.s32 %s78, 1
    %s80 = scalar_select %p77, %s78, %s79
    %p83 = pneg %p77
    %p84 = scmp.eq.s32.totalorder %s19, 1
    %p85 = por %p83, %p84
    %p86 = scmp.ne.s32.totalorder %s78, %s81
    %p87 = scmp.eq.s32.totalorder %s19, 0
    %p88 = por %p86, %p87
    %p89 = scmp.ne.s32.totalorder %s78, %s81
    %p90 = scmp.eq.s32.totalorder %s24, 1
    %p91 = por %p89, %p90
    %p92 = scmp.ne.s32.totalorder %s81, %s82
    %p93 = scmp.eq.s32.totalorder %s24, 0
    %p94 = por %p92, %p93
    %p95 = scmp.ne.s32.totalorder %s81, %s82
    %p96 = scmp.eq.s32.totalorder %s25, 1
    %p97 = por %p95, %p96
    %p99 = scmp.ne.s32.totalorder %s82, %s98
    %p100 = scmp.eq.s32.totalorder %s25, 0
    %p101 = por %p99, %p100
    %s102 = ssub.s32 %s26, %s45
    %s103 = ssub.s32 %s28, %s37
    %s104 = sor.u32 %s102, %s103
    %p105 = scmp.eq.s32.totalorder %s104, 0
    %s107 = sadd.s32 %s106, 1
    %s108 = scalar_select %p105, %s106, %s107
    %p111 = pneg %p105
    %p112 = scmp.eq.s32.totalorder %s19, 1
    %p113 = por %p111, %p112
    %p114 = scmp.ne.s32.totalorder %s106, %s109
    %p115 = scmp.eq.s32.totalorder %s19, 0
    %p116 = por %p114, %p115
    %p117 = scmp.ne.s32.totalorder %s106, %s109
    %p118 = scmp.eq.s32.totalorder %s24, 1
    %p119 = por %p117, %p118
    %p120 = scmp.ne.s32.totalorder %s109, %s110
    %p121 = scmp.eq.s32.totalorder %s24, 0
    %p122 = por %p120, %p121
    %p123 = scmp.ne.s32.totalorder %s109, %s110
    %p124 = scmp.eq.s32.totalorder %s25, 1
    %p125 = por %p123, %p124
    %p127 = scmp.ne.s32.totalorder %s110, %s126
    %p128 = scmp.eq.s32.totalorder %s25, 0
    %p129 = por %p127, %p128
    %s130 = ssub.s32 %s26, %s45
    %s131 = ssub.s32 %s28, %s37
    %s132 = sor.u32 %s130, %s131
    %p133 = scmp.eq.s32.totalorder %s132, 0
    %s135 = sadd.s32 %s134, 1
    %s136 = scalar_select %p133, %s134, %s135
    %p139 = pneg %p133
    %p140 = scmp.eq.s32.totalorder %s19, 1
    %p141 = por %p139, %p140
    %p142 = scmp.ne.s32.totalorder %s134, %s137
    %p143 = scmp.eq.s32.totalorder %s19, 0
    %p144 = por %p142, %p143
    %p145 = scmp.ne.s32.totalorder %s134, %s137
    %p146 = scmp.eq.s32.totalorder %s24, 1
    %p147 = por %p145, %p146
    %p148 = scmp.ne.s32.totalorder %s137, %s138
    %p149 = scmp.eq.s32.totalorder %s24, 0
    %p150 = por %p148, %p149
    %p151 = scmp.ne.s32.totalorder %s137, %s138
    %p152 = scmp.eq.s32.totalorder %s25, 1
    %p153 = por %p151, %p152
    %p155 = scmp.ne.s32.totalorder %s138, %s154
    %p156 = scmp.eq.s32.totalorder %s25, 0
    %p157 = por %p155, %p156
    %s158 = ssub.s32 %s26, %s45
    %s159 = ssub.s32 %s27, %s41
    %s160 = sor.u32 %s158, %s159
    %p161 = scmp.eq.s32.totalorder %s160, 0
    %s163 = sadd.s32 %s162, 1
    %s164 = scalar_select %p161, %s162, %s163
    %p167 = pneg %p161
    %p168 = scmp.eq.s32.totalorder %s19, 1
    %p169 = por %p167, %p168
    %p170 = scmp.ne.s32.totalorder %s162, %s165
    %p171 = scmp.eq.s32.totalorder %s19, 0
    %p172 = por %p170, %p171
    %p173 = scmp.ne.s32.totalorder %s162, %s165
    %p174 = scmp.eq.s32.totalorder %s24, 1
    %p175 = por %p173, %p174
    %p176 = scmp.ne.s32.totalorder %s165, %s166
    %p177 = scmp.eq.s32.totalorder %s24, 0
    %p178 = por %p176, %p177
    %p179 = scmp.ne.s32.totalorder %s165, %s166
    %p180 = scmp.eq.s32.totalorder %s25, 1
    %p181 = por %p179, %p180
    %p183 = scmp.ne.s32.totalorder %s166, %s182
    %p184 = scmp.eq.s32.totalorder %s25, 0
    %p185 = por %p183, %p184
    %s186 = ssub.s32 %s26, %s45
    %s187 = ssub.s32 %s27, %s41
    %s188 = sor.u32 %s186, %s187
    %p189 = scmp.eq.s32.totalorder %s188, 0
    %s191 = sadd.s32 %s190, 1
    %s192 = scalar_select %p189, %s190, %s191
    %p195 = pneg %p189
    %p196 = scmp.eq.s32.totalorder %s19, 1
    %p197 = por %p195, %p196
    %p198 = scmp.ne.s32.totalorder %s190, %s193
    %p199 = scmp.eq.s32.totalorder %s19, 0
    %p200 = por %p198, %p199
    %p201 = scmp.ne.s32.totalorder %s190, %s193
    %p202 = scmp.eq.s32.totalorder %s24, 1
    %p203 = por %p201, %p202
    %p204 = scmp.ne.s32.totalorder %s193, %s194
    %p205 = scmp.eq.s32.totalorder %s24, 0
    %p206 = por %p204, %p205
    %p207 = scmp.ne.s32.totalorder %s193, %s194
    %p208 = scmp.eq.s32.totalorder %s25, 1
    %p209 = por %p207, %p208
    %p211 = scmp.ne.s32.totalorder %s194, %s210
    %p212 = scmp.eq.s32.totalorder %s25, 0
    %p213 = por %p211, %p212
    %p214 = scmp.le.s32.totalorder 1, %s19
    %p215 = scmp.lt.s32.totalorder %s19, 3
    %p216 = pnand %p214, %p215
    %p217 = pneg %p216
    // Predicated region
    $region9: #{desc_cgf_loss.1} parent=5 // pred_check
      _
    $region10: #{desc_cgf_loss.1} parent=5 // pred_check_branch
      %219 = sbr.rel (%p216) target = $region12
    $region11: #{desc_cgf_loss.1} parent=5 // pred_region
      %s220 = ssub.s32 %s19, 1
    $region12: #{desc_cgf_loss.1} parent=5 // pred_fallthru
      _
    %p221 = scmp.lt.s32.totalorder %s19, 2
    // Predicated region
    $region13: #{desc_cgf_loss.1} parent=5 // pred_check
      %p222 = pneg %p221
    $region14: #{desc_cgf_loss.1} parent=5 // pred_check_branch
      %224 = sbr.rel (%p222) target = $region16
    $region15: #{desc_cgf_loss.1} parent=5 // pred_region
      // Predicated region
      $region17: #{desc_cgf_loss.1} parent=15 // pred_check
        %p225 = pneg %p60
      $region18: #{desc_cgf_loss.1} parent=15 // pred_check_branch
        %227 = sbr.rel (%p225) target = $region20
      $region19: #{desc_cgf_loss.1} parent=15 // pred_region
        %p228 = scmp.lt.s32.totalorder %s26, 1
        %s229 = scalar_select %p228, %s26, 1
        %p230 = scmp.lt.s32.totalorder %s27, 0
        %s231 = scalar_select %p230, %s27, 0
        %s232 = sadd.s32 %s231, %s229
        %s233 = smul.addr %s232, 8
        %s234 = scalar_lea.vmem %s1, %s233
      $region20: #{desc_cgf_loss.1} parent=15 // pred_fallthru
        _
      // Predicated region
      $region21: #{desc_cgf_loss.1} parent=15 // pred_check
        %p235 = pneg %p88
      $region22: #{desc_cgf_loss.1} parent=15 // pred_check_branch
        %237 = sbr.rel (%p235) target = $region24
      $region23: #{desc_cgf_loss.1} parent=15 // pred_region
        %p238 = scmp.lt.s32.totalorder %s26, 1
        %s239 = scalar_select %p238, %s26, 1
        %p240 = scmp.lt.s32.totalorder %s27, 0
        %s241 = scalar_select %p240, %s27, 0
        %s242 = smul.addr %s239, 5
        %s243 = sadd.s32 %s241, %s242
        %s244 = smul.addr %s243, 8
        %s245 = scalar_lea.vmem %s2, %s244
      $region24: #{desc_cgf_loss.1} parent=15 // pred_fallthru
        _
      // Predicated region
      $region25: #{desc_cgf_loss.1} parent=15 // pred_check
        %p246 = pneg %p116
      $region26: #{desc_cgf_loss.1} parent=15 // pred_check_branch
        %248 = sbr.rel (%p246) target = $region28
      $region27: #{desc_cgf_loss.1} parent=15 // pred_region
        %s249 = smul.u32 16, %s28
        %p250 = scmp.lt.s32.totalorder %s26, 1
        %s251 = scalar_select %p250, %s26, 1
        %p252 = scmp.lt.s32.totalorder %s249, 15
        %s253 = scalar_select %p252, %s249, 15
        %s254 = smul.addr %s251, 16
        %s255 = sadd.s32 %s253, %s254
        %s256 = smul.addr %s255, 8
        %s257 = scalar_lea.vmem %s3, %s256
        %s258 = smul.u32 16, %s28
      $region28: #{desc_cgf_loss.1} parent=15 // pred_fallthru
        _
      // Predicated region
      $region29: #{desc_cgf_loss.1} parent=15 // pred_check
        %p259 = pneg %p144
      $region30: #{desc_cgf_loss.1} parent=15 // pred_check_branch
        %261 = sbr.rel (%p259) target = $region32
      $region31: #{desc_cgf_loss.1} parent=15 // pred_region
        %s262 = smul.u32 16, %s28
        %p263 = scmp.lt.s32.totalorder %s26, 1
        %s264 = scalar_select %p263, %s26, 1
        %p265 = scmp.lt.s32.totalorder %s262, 15
        %s266 = scalar_select %p265, %s262, 15
        %s267 = smul.addr %s264, 16
        %s268 = sadd.s32 %s266, %s267
        %s269 = smul.addr %s268, 8
        %s270 = scalar_lea.vmem %s4, %s269
        %s271 = smul.u32 16, %s28
      $region32: #{desc_cgf_loss.1} parent=15 // pred_fallthru
        _
    $region16: #{desc_cgf_loss.1} parent=5 // pred_fallthru
      _
    %p272 = scmp.le.s32.totalorder 1, %s19
    %p273 = scmp.lt.s32.totalorder %s19, 3
    %p274 = pnand %p272, %p273
    %p275 = pneg %p274
    // Predicated region
    $region33: #{desc_cgf_loss.1} parent=5 // pred_check
      _
    $region34: #{desc_cgf_loss.1} parent=5 // pred_check_branch
      %277 = sbr.rel (%p274) target = $region36
    $region35: #{desc_cgf_loss.1} parent=5 // pred_region
      %s278 = ssub.s32 %s19, 1
      %p279 = scmp.lt.s32.totalorder %s29, 1
      %s280 = scalar_select %p279, %s29, 1
      %p281 = scmp.lt.s32.totalorder %s30, 0
      %s282 = scalar_select %p281, %s30, 0
      %s283 = sadd.s32 %s282, %s280
      %s284 = smul.addr %s283, 8
      %s285 = scalar_lea.vmem %s1, %s284
      %p286 = pneg %p66
      %p287 = pneg %p63
      %p288 = scmp.lt.s32.totalorder %s29, 1
      %s289 = scalar_select %p288, %s29, 1
      %p290 = scmp.lt.s32.totalorder %s30, 0
      %s291 = scalar_select %p290, %s30, 0
      %s292 = smul.addr %s289, 5
      %s293 = sadd.s32 %s291, %s292
      %s294 = smul.addr %s293, 8
      %s295 = scalar_lea.vmem %s2, %s294
      %p296 = pneg %p94
      %p297 = pneg %p91
      %s298 = smul.u32 16, %s31
      %p299 = scmp.lt.s32.totalorder %s29, 1
      %s300 = scalar_select %p299, %s29, 1
      %p301 = scmp.lt.s32.totalorder %s298, 15
      %s302 = scalar_select %p301, %s298, 15
      %s303 = smul.addr %s300, 16
      %s304 = sadd.s32 %s302, %s303
      %s305 = smul.addr %s304, 8
      %s306 = scalar_lea.vmem %s3, %s305
      %p307 = pneg %p122
      %p308 = pneg %p119
      %s309 = smul.u32 16, %s31
      %p310 = scmp.lt.s32.totalorder %s29, 1
      %s311 = scalar_select %p310, %s29, 1
      %p312 = scmp.lt.s32.totalorder %s309, 15
      %s313 = scalar_select %p312, %s309, 15
      %s314 = smul.addr %s311, 16
      %s315 = sadd.s32 %s313, %s314
      %s316 = smul.addr %s315, 8
      %s317 = scalar_lea.vmem %s4, %s316
      %p318 = pneg %p150
      %p319 = pneg %p147
      %p320 = pneg %p178
      %p321 = pneg %p175
      %p322 = scmp.lt.s32.totalorder %s29, 1
      %s323 = scalar_select %p322, %s29, 1
      %p324 = scmp.lt.s32.totalorder %s30, 0
      %s325 = scalar_select %p324, %s30, 0
      %s326 = sadd.s32 %s325, %s323
      %s327 = scalar_lea.vmem %s5, %s326
      %p328 = pneg %p206
      %p329 = pneg %p203
      %p330 = scmp.lt.s32.totalorder %s29, 1
      %s331 = scalar_select %p330, %s29, 1
      %p332 = scmp.lt.s32.totalorder %s30, 0
      %s333 = scalar_select %p332, %s30, 0
      %s334 = sadd.s32 %s333, %s331
      %s335 = scalar_lea.vmem %s6, %s334
      %p336 = scmp.lt.s32.totalorder %s29, 1
      %s337 = scalar_select %p336, %s29, 1
      %p338 = scmp.lt.s32.totalorder %s30, 0
      %s339 = scalar_select %p338, %s30, 0
      %s340 = sadd.s32 %s339, %s337
      %s341 = smul.addr %s340, 8
      %s342 = scalar_lea.vmem %s1, %s341
      %p343 = scmp.lt.s32.totalorder %s29, 1
      %s344 = scalar_select %p343, %s29, 1
      %p345 = scmp.lt.s32.totalorder %s30, 0
      %s346 = scalar_select %p345, %s30, 0
      %s347 = smul.addr %s344, 5
      %s348 = sadd.s32 %s346, %s347
      %s349 = smul.addr %s348, 8
      %s350 = scalar_lea.vmem %s2, %s349
      %s351 = smul.u32 16, %s31
      %p352 = scmp.lt.s32.totalorder %s29, 1
      %s353 = scalar_select %p352, %s29, 1
      %p354 = scmp.lt.s32.totalorder %s351, 15
      %s355 = scalar_select %p354, %s351, 15
      %s356 = smul.addr %s353, 16
      %s357 = sadd.s32 %s355, %s356
      %s358 = smul.addr %s357, 8
      %s359 = scalar_lea.vmem %s3, %s358
      %s360 = smul.u32 16, %s31
      %s361 = smul.u32 16, %s31
      %p362 = scmp.lt.s32.totalorder %s29, 1
      %s363 = scalar_select %p362, %s29, 1
      %p364 = scmp.lt.s32.totalorder %s361, 15
      %s365 = scalar_select %p364, %s361, 15
      %s366 = smul.addr %s363, 16
      %s367 = sadd.s32 %s365, %s366
      %s368 = smul.addr %s367, 8
      %s369 = scalar_lea.vmem %s4, %s368
      %s370 = smul.u32 16, %s31
      %p371 = scmp.lt.s32.totalorder %s29, 1
      %s372 = scalar_select %p371, %s29, 1
      %p373 = scmp.lt.s32.totalorder %s30, 0
      %s374 = scalar_select %p373, %s30, 0
      %s375 = sadd.s32 %s374, %s372
      %s376 = scalar_lea.vmem %s5, %s375
      %p377 = scmp.lt.s32.totalorder %s29, 1
      %s378 = scalar_select %p377, %s29, 1
      %p379 = scmp.lt.s32.totalorder %s30, 0
      %s380 = scalar_select %p379, %s30, 0
      %s381 = sadd.s32 %s380, %s378
      %s382 = scalar_lea.vmem %s6, %s381
      %v383 = vld [vmem:[%s342] sm:$0x1f]
      %v384 = vld [vmem:[%s350] sm:$0xff]
      %v385 = vld [vmem:[%s350 + $0x8] sm:$0xff]
      %v386 = vld [vmem:[%s350 + $0x10] sm:$0xff]
      %v387 = vld [vmem:[%s350 + $0x18] sm:$0xff]
      %v388 = vld [vmem:[%s350 + $0x20] sm:$0x3]
      %v389 = vld [vmem:[%s359] sm:$0xff]
      %v390 = vld [vmem:[%s359 + $0x8] sm:$0xff]
      %v391 = vld [vmem:[%s359 + $0x10] sm:$0xff]
      %v392 = vld [vmem:[%s359 + $0x18] sm:$0xff]
      %v393 = vld [vmem:[%s359 + $0x20] sm:$0xff]
      %v394 = vld [vmem:[%s359 + $0x28] sm:$0xff]
      %v395 = vld [vmem:[%s359 + $0x30] sm:$0xff]
      %v396 = vld [vmem:[%s359 + $0x38] sm:$0xff]
      %v397 = vld [vmem:[%s359 + $0x40] sm:$0xff]
      %v398 = vld [vmem:[%s359 + $0x48] sm:$0xff]
      %v399 = vld [vmem:[%s359 + $0x50] sm:$0xff]
      %v400 = vld [vmem:[%s359 + $0x58] sm:$0xff]
      %v401 = vld [vmem:[%s359 + $0x60] sm:$0xff]
      %v402 = vld [vmem:[%s359 + $0x68] sm:$0xff]
      %v403 = vld [vmem:[%s359 + $0x70] sm:$0xff]
      %v404 = vld [vmem:[%s359 + $0x78] sm:$0xff]
      %v405 = vld [vmem:[%s369] sm:$0xff]
      %v406 = vld [vmem:[%s369 + $0x8] sm:$0xff]
      %v407 = vld [vmem:[%s369 + $0x10] sm:$0xff]
      %v408 = vld [vmem:[%s369 + $0x18] sm:$0xff]
      %v409 = vld [vmem:[%s369 + $0x20] sm:$0xff]
      %v410 = vld [vmem:[%s369 + $0x28] sm:$0xff]
      %v411 = vld [vmem:[%s369 + $0x30] sm:$0xff]
      %v412 = vld [vmem:[%s369 + $0x38] sm:$0xff]
      %v413 = vld [vmem:[%s369 + $0x40] sm:$0xff]
      %v414 = vld [vmem:[%s369 + $0x48] sm:$0xff]
      %v415 = vld [vmem:[%s369 + $0x50] sm:$0xff]
      %v416 = vld [vmem:[%s369 + $0x58] sm:$0xff]
      %v417 = vld [vmem:[%s369 + $0x60] sm:$0xff]
      %v418 = vld [vmem:[%s369 + $0x68] sm:$0xff]
      %v419 = vld [vmem:[%s369 + $0x70] sm:$0xff]
      %v420 = vld [vmem:[%s369 + $0x78] sm:$0xff]
      %vm421 = vcmask 39936
      %v423 = vsel %vm421, %v389, 0
      %v426 = vsel %vm421, %v390, 0
      %v429 = vsel %vm421, %v391, 0
      %v432 = vsel %vm421, %v392, 0
      %v435 = vsel %vm421, %v393, 0
      %v438 = vsel %vm421, %v394, 0
      %v441 = vsel %vm421, %v395, 0
      %v444 = vsel %vm421, %v396, 0
      %v447 = vsel %vm421, %v397, 0
      %v450 = vsel %vm421, %v398, 0
      %v453 = vsel %vm421, %v399, 0
      %v456 = vsel %vm421, %v400, 0
      %v459 = vsel %vm421, %v401, 0
      %v462 = vsel %vm421, %v402, 0
      %v465 = vsel %vm421, %v403, 0
      %v468 = vsel %vm421, %v404, 0
      %vm470 = vcmask 1044480
      %v472 = vsel %vm470, %v383, 0
      %474 = vmatprep.subr.mxu0 0.0
      %475 = vmatpush1.msra.mxu0 %v472
      %476 = vmatprep.subr.mxu0 0.0
      %477 = vmatpush1.msra.mxu0 0.0
      %478 = vmatprep.subr.mxu0 0.0
      %479 = vmatpush1.msra.mxu0 0.0
      %480 = vmatprep.subr.mxu0 0.0
      %481 = vmatpush1.msra.mxu0 0.0
      %482 = vmatprep.subr.mxu0 0.0
      %483 = vmatpush1.msra.mxu0 0.0
      %484 = vmatprep.subr.mxu0 0.0
      %485 = vmatpush1.msra.mxu0 0.0
      %486 = vmatprep.subr.mxu0 0.0
      %487 = vmatpush1.msra.mxu0 0.0
      %488 = vmatprep.subr.mxu0 0.0
      %489 = vmatpush1.msra.mxu0 0.0
      %490 = vmatprep.subr.mxu0 0.0
      %491 = vmatpush1.msra.mxu0 0.0
      %492 = vmatprep.subr.mxu0 0.0
      %493 = vmatpush1.msra.mxu0 0.0
      %494 = vmatprep.subr.mxu0 0.0
      %495 = vmatpush1.msra.mxu0 0.0
      %496 = vmatprep.subr.mxu0 0.0
      %497 = vmatpush1.msra.mxu0 0.0
      %498 = vmatprep.subr.mxu0 0.0
      %499 = vmatpush1.msra.mxu0 0.0
      %500 = vmatprep.subr.mxu0 0.0
      %501 = vmatpush1.msra.mxu0 0.0
      %502 = vmatprep.subr.mxu0 0.0
      %503 = vmatpush1.msra.mxu0 0.0
      %504 = vmatprep.subr.mxu0 0.0
      %505 = vmatpush1.msra.mxu0 0.0
      %506 = vmatprep.subr.mxu0 0.0
      %507 = vmatpush1.msra.mxu0 0.0
      %508 = vmatprep.subr.mxu0 0.0
      %509 = vmatpush1.msra.mxu0 0.0
      %510 = vmatprep.subr.mxu0 0.0
      %511 = vmatpush1.msra.mxu0 0.0
      %512 = vmatprep.subr.mxu0 0.0
      %513 = vmatpush1.msra.mxu0 0.0
      %514 = vmatprep.subr.mxu0 0.0
      %515 = vmatpush1.msra.mxu0 0.0
      %516 = vmatprep.subr.mxu0 0.0
      %517 = vmatpush1.msra.mxu0 0.0
      %518 = vmatprep.subr.mxu0 0.0
      %519 = vmatpush1.msra.mxu0 0.0
      %520 = vmatprep.subr.mxu0 0.0
      %521 = vmatpush1.msra.mxu0 0.0
      %522 = vmatprep.subr.mxu0 0.0
      %523 = vmatpush1.msra.mxu0 0.0
      %524 = vmatprep.subr.mxu0 0.0
      %525 = vmatpush1.msra.mxu0 0.0
      %526 = vmatprep.subr.mxu0 0.0
      %527 = vmatpush1.msra.mxu0 0.0
      %528 = vmatprep.subr.mxu0 0.0
      %529 = vmatpush1.msra.mxu0 0.0
      %530 = vmatprep.subr.mxu0 0.0
      %531 = vmatpush1.msra.mxu0 0.0
      %532 = vmatprep.subr.mxu0 0.0
      %533 = vmatpush1.msra.mxu0 0.0
      %534 = vmatprep.subr.mxu0 0.0
      %535 = vmatpush1.msra.mxu0 0.0
      %536 = vmatprep.subr.mxu0 0.0
      %537 = vmatpush1.msra.mxu0 0.0
      %538 = vmatprep.mubr.f32.mxu0 0.0
      %539 = vmatmul.mubr.f32.gmra.mrb[0].mxu0 %v423
      %v540 = vpop.f32.mrb[0].mxu0
      %v541 = vadd.f32 0.0, %v540
      %v542 = vpop.f32.mrb[0].mxu0
      %543 = vmatprep.mubr.f32.mxu0 0.0
      %544 = vmatmul.mubr.f32.gmra.mrb[0].mxu0 %v426
      %v545 = vpop.f32.mrb[0].mxu0
      %v546 = vadd.f32 0.0, %v545
      %v547 = vpop.f32.mrb[0].mxu0
      %548 = vmatprep.mubr.f32.mxu0 0.0
      %549 = vmatmul.mubr.f32.gmra.mrb[0].mxu0 %v429
      %v550 = vpop.f32.mrb[0].mxu0
      %v551 = vadd.f32 0.0, %v550
      %v552 = vpop.f32.mrb[0].mxu0
      %553 = vmatprep.mubr.f32.mxu0 0.0
      %554 = vmatmul.mubr.f32.gmra.mrb[0].mxu0 %v432
      %v555 = vpop.f32.mrb[0].mxu0
      %v556 = vadd.f32 0.0, %v555
      %v557 = vpop.f32.mrb[0].mxu0
      %558 = vmatprep.mubr.f32.mxu0 0.0
      %559 = vmatmul.mubr.f32.gmra.mrb[0].mxu0 %v435
      %v560 = vpop.f32.mrb[0].mxu0
      %v561 = vadd.f32 0.0, %v560
      %v562 = vpop.f32.mrb[0].mxu0
      %563 = vmatprep.mubr.f32.mxu0 0.0
      %564 = vmatmul.mubr.f32.gmra.mrb[0].mxu0 %v438
      %v565 = vpop.f32.mrb[0].mxu0
      %v566 = vadd.f32 0.0, %v565
      %v567 = vpop.f32.mrb[0].mxu0
      %568 = vmatprep.mubr.f32.mxu0 0.0
      %569 = vmatmul.mubr.f32.gmra.mrb[0].mxu0 %v441
      %v570 = vpop.f32.mrb[0].mxu0
      %v571 = vadd.f32 0.0, %v570
      %v572 = vpop.f32.mrb[0].mxu0
      %573 = vmatprep.mubr.f32.mxu0 0.0
      %574 = vmatmul.mubr.f32.gmra.mrb[0].mxu0 %v444
      %v575 = vpop.f32.mrb[0].mxu0
      %v576 = vadd.f32 0.0, %v575
      %v577 = vpop.f32.mrb[0].mxu0
      %578 = vmatprep.mubr.f32.mxu0 0.0
      %579 = vmatmul.mubr.f32.gmra.mrb[0].mxu0 %v447
      %v580 = vpop.f32.mrb[0].mxu0
      %v581 = vadd.f32 0.0, %v580
      %v582 = vpop.f32.mrb[0].mxu0
      %583 = vmatprep.mubr.f32.mxu0 0.0
      %584 = vmatmul.mubr.f32.gmra.mrb[0].mxu0 %v450
      %v585 = vpop.f32.mrb[0].mxu0
      %v586 = vadd.f32 0.0, %v585
      %v587 = vpop.f32.mrb[0].mxu0
      %588 = vmatprep.mubr.f32.mxu0 0.0
      %589 = vmatmul.mubr.f32.gmra.mrb[0].mxu0 %v453
      %v590 = vpop.f32.mrb[0].mxu0
      %v591 = vadd.f32 0.0, %v590
      %v592 = vpop.f32.mrb[0].mxu0
      %593 = vmatprep.mubr.f32.mxu0 0.0
      %594 = vmatmul.mubr.f32.gmra.mrb[0].mxu0 %v456
      %v595 = vpop.f32.mrb[0].mxu0
      %v596 = vadd.f32 0.0, %v595
      %v597 = vpop.f32.mrb[0].mxu0
      %598 = vmatprep.mubr.f32.mxu0 0.0
      %599 = vmatmul.mubr.f32.gmra.mrb[0].mxu0 %v459
      %v600 = vpop.f32.mrb[0].mxu0
      %v601 = vadd.f32 0.0, %v600
      %v602 = vpop.f32.mrb[0].mxu0
      %603 = vmatprep.mubr.f32.mxu0 0.0
      %604 = vmatmul.mubr.f32.gmra.mrb[0].mxu0 %v462
      %v605 = vpop.f32.mrb[0].mxu0
      %v606 = vadd.f32 0.0, %v605
      %v607 = vpop.f32.mrb[0].mxu0
      %608 = vmatprep.mubr.f32.mxu0 0.0
      %609 = vmatmul.mubr.f32.gmra.mrb[0].mxu0 %v465
      %v610 = vpop.f32.mrb[0].mxu0
      %v611 = vadd.f32 0.0, %v610
      %v612 = vpop.f32.mrb[0].mxu0
      %613 = vmatprep.mubr.f32.mxu0 0.0
      %614 = vmatmul.mubr.f32.gmra.mrb[0].mxu0 %v468
      %v615 = vpop.f32.mrb[0].mxu0
      %v616 = vadd.f32 0.0, %v615
      %v617 = vpop.f32.mrb[0].mxu0
      %618 = vdwg.mxu0
      %v619 = vmax.f32 %v541, 0.0
      %v620 = vmax.f32 %v546, 0.0
      %v621 = vmax.f32 %v551, 0.0
      %v622 = vmax.f32 %v556, 0.0
      %v623 = vmax.f32 %v561, 0.0
      %v624 = vmax.f32 %v566, 0.0
      %v625 = vmax.f32 %v571, 0.0
      %v626 = vmax.f32 %v576, 0.0
      %v627 = vmax.f32 %v581, 0.0
      %v628 = vmax.f32 %v586, 0.0
      %v629 = vmax.f32 %v591, 0.0
      %v630 = vmax.f32 %v596, 0.0
      %v631 = vmax.f32 %v601, 0.0
      %v632 = vmax.f32 %v606, 0.0
      %v633 = vmax.f32 %v611, 0.0
      %v634 = vmax.f32 %v616, 0.0
      %vm635 = vcmask 277504
      %v637 = vsel %vm635, %v405, 0
      %v640 = vsel %vm635, %v406, 0
      %v643 = vsel %vm635, %v407, 0
      %v646 = vsel %vm635, %v408, 0
      %v649 = vsel %vm635, %v409, 0
      %v652 = vsel %vm635, %v410, 0
      %v655 = vsel %vm635, %v411, 0
      %v658 = vsel %vm635, %v412, 0
      %v661 = vsel %vm635, %v413, 0
      %v664 = vsel %vm635, %v414, 0
      %v667 = vsel %vm635, %v415, 0
      %v670 = vsel %vm635, %v416, 0
      %v673 = vsel %vm635, %v417, 0
      %v676 = vsel %vm635, %v418, 0
      %v679 = vsel %vm635, %v419, 0
      %v682 = vsel %vm635, %v420, 0
      %vm684 = vcmask 1041408
      %v686 = vsel %vm684, %v388, 0
      %688 = vmatprep.subr.mxu0 0.0
      %689 = vmatpush1.msra.mxu0 %v384
      %690 = vmatprep.subr.mxu0 0.0
      %691 = vmatpush1.msra.mxu0 %v385
      %692 = vmatprep.subr.mxu0 0.0
      %693 = vmatpush1.msra.mxu0 %v386
      %694 = vmatprep.subr.mxu0 0.0
      %695 = vmatpush1.msra.mxu0 %v387
      %696 = vmatprep.subr.mxu0 0.0
      %697 = vmatpush1.msra.mxu0 %v686
      %698 = vmatprep.subr.mxu0 0.0
      %699 = vmatpush1.msra.mxu0 0.0
      %700 = vmatprep.subr.mxu0 0.0
      %701 = vmatpush1.msra.mxu0 0.0
      %702 = vmatprep.subr.mxu0 0.0
      %703 = vmatpush1.msra.mxu0 0.0
      %704 = vmatprep.subr.mxu0 0.0
      %705 = vmatpush1.msra.mxu0 0.0
      %706 = vmatprep.subr.mxu0 0.0
      %707 = vmatpush1.msra.mxu0 0.0
      %708 = vmatprep.subr.mxu0 0.0
      %709 = vmatpush1.msra.mxu0 0.0
      %710 = vmatprep.subr.mxu0 0.0
      %711 = vmatpush1.msra.mxu0 0.0
      %712 = vmatprep.subr.mxu0 0.0
      %713 = vmatpush1.msra.mxu0 0.0
      %714 = vmatprep.subr.mxu0 0.0
      %715 = vmatpush1.msra.mxu0 0.0
      %716 = vmatprep.subr.mxu0 0.0
      %717 = vmatpush1.msra.mxu0 0.0
      %718 = vmatprep.subr.mxu0 0.0
      %719 = vmatpush1.msra.mxu0 0.0
      %720 = vmatprep.subr.mxu0 0.0
      %721 = vmatpush1.msra.mxu0 0.0
      %722 = vmatprep.subr.mxu0 0.0
      %723 = vmatpush1.msra.mxu0 0.0
      %724 = vmatprep.subr.mxu0 0.0
      %725 = vmatpush1.msra.mxu0 0.0
      %726 = vmatprep.subr.mxu0 0.0
      %727 = vmatpush1.msra.mxu0 0.0
      %728 = vmatprep.subr.mxu0 0.0
      %729 = vmatpush1.msra.mxu0 0.0
      %730 = vmatprep.subr.mxu0 0.0
      %731 = vmatpush1.msra.mxu0 0.0
      %732 = vmatprep.subr.mxu0 0.0
      %733 = vmatpush1.msra.mxu0 0.0
      %734 = vmatprep.subr.mxu0 0.0
      %735 = vmatpush1.msra.mxu0 0.0
      %736 = vmatprep.subr.mxu0 0.0
      %737 = vmatpush1.msra.mxu0 0.0
      %738 = vmatprep.subr.mxu0 0.0
      %739 = vmatpush1.msra.mxu0 0.0
      %740 = vmatprep.subr.mxu0 0.0
      %741 = vmatpush1.msra.mxu0 0.0
      %742 = vmatprep.subr.mxu0 0.0
      %743 = vmatpush1.msra.mxu0 0.0
      %744 = vmatprep.subr.mxu0 0.0
      %745 = vmatpush1.msra.mxu0 0.0
      %746 = vmatprep.subr.mxu0 0.0
      %747 = vmatpush1.msra.mxu0 0.0
      %748 = vmatprep.subr.mxu0 0.0
      %749 = vmatpush1.msra.mxu0 0.0
      %750 = vmatprep.subr.mxu0 0.0
      %751 = vmatpush1.msra.mxu0 0.0
      %752 = vmatprep.mubr.f32.mxu0 0.0
      %753 = vmatmul.mubr.f32.gmra.mrb[0].mxu0 %v637
      %v754 = vpop.f32.mrb[0].mxu0
      %v755 = vadd.f32 0.0, %v754
      %v756 = vpop.f32.mrb[0].mxu0
      %757 = vmatprep.mubr.f32.mxu0 0.0
      %758 = vmatmul.mubr.f32.gmra.mrb[0].mxu0 %v640
      %v759 = vpop.f32.mrb[0].mxu0
      %v760 = vadd.f32 0.0, %v759
      %v761 = vpop.f32.mrb[0].mxu0
      %762 = vmatprep.mubr.f32.mxu0 0.0
      %763 = vmatmul.mubr.f32.gmra.mrb[0].mxu0 %v643
      %v764 = vpop.f32.mrb[0].mxu0
      %v765 = vadd.f32 0.0, %v764
      %v766 = vpop.f32.mrb[0].mxu0
      %767 = vmatprep.mubr.f32.mxu0 0.0
      %768 = vmatmul.mubr.f32.gmra.mrb[0].mxu0 %v646
      %v769 = vpop.f32.mrb[0].mxu0
      %v770 = vadd.f32 0.0, %v769
      %v771 = vpop.f32.mrb[0].mxu0
      %772 = vmatprep.mubr.f32.mxu0 0.0
      %773 = vmatmul.mubr.f32.gmra.mrb[0].mxu0 %v649
      %v774 = vpop.f32.mrb[0].mxu0
      %v775 = vadd.f32 0.0, %v774
      %v776 = vpop.f32.mrb[0].mxu0
      %777 = vmatprep.mubr.f32.mxu0 0.0
      %778 = vmatmul.mubr.f32.gmra.mrb[0].mxu0 %v652
      %v779 = vpop.f32.mrb[0].mxu0
      %v780 = vadd.f32 0.0, %v779
      %v781 = vpop.f32.mrb[0].mxu0
      %782 = vmatprep.mubr.f32.mxu0 0.0
      %783 = vmatmul.mubr.f32.gmra.mrb[0].mxu0 %v655
      %v784 = vpop.f32.mrb[0].mxu0
      %v785 = vadd.f32 0.0, %v784
      %v786 = vpop.f32.mrb[0].mxu0
      %787 = vmatprep.mubr.f32.mxu0 0.0
      %788 = vmatmul.mubr.f32.gmra.mrb[0].mxu0 %v658
      %v789 = vpop.f32.mrb[0].mxu0
      %v790 = vadd.f32 0.0, %v789
      %v791 = vpop.f32.mrb[0].mxu0
      %792 = vmatprep.mubr.f32.mxu0 0.0
      %793 = vmatmul.mubr.f32.gmra.mrb[0].mxu0 %v661
      %v794 = vpop.f32.mrb[0].mxu0
      %v795 = vadd.f32 0.0, %v794
      %v796 = vpop.f32.mrb[0].mxu0
      %797 = vmatprep.mubr.f32.mxu0 0.0
      %798 = vmatmul.mubr.f32.gmra.mrb[0].mxu0 %v664
      %v799 = vpop.f32.mrb[0].mxu0
      %v800 = vadd.f32 0.0, %v799
      %v801 = vpop.f32.mrb[0].mxu0
      %802 = vmatprep.mubr.f32.mxu0 0.0
      %803 = vmatmul.mubr.f32.gmra.mrb[0].mxu0 %v667
      %v804 = vpop.f32.mrb[0].mxu0
      %v805 = vadd.f32 0.0, %v804
      %v806 = vpop.f32.mrb[0].mxu0
      %807 = vmatprep.mubr.f32.mxu0 0.0
      %808 = vmatmul.mubr.f32.gmra.mrb[0].mxu0 %v670
      %v809 = vpop.f32.mrb[0].mxu0
      %v810 = vadd.f32 0.0, %v809
      %v811 = vpop.f32.mrb[0].mxu0
      %812 = vmatprep.mubr.f32.mxu0 0.0
      %813 = vmatmul.mubr.f32.gmra.mrb[0].mxu0 %v673
      %v814 = vpop.f32.mrb[0].mxu0
      %v815 = vadd.f32 0.0, %v814
      %v816 = vpop.f32.mrb[0].mxu0
      %817 = vmatprep.mubr.f32.mxu0 0.0
      %818 = vmatmul.mubr.f32.gmra.mrb[0].mxu0 %v676
      %v819 = vpop.f32.mrb[0].mxu0
      %v820 = vadd.f32 0.0, %v819
      %v821 = vpop.f32.mrb[0].mxu0
      %822 = vmatprep.mubr.f32.mxu0 0.0
      %823 = vmatmul.mubr.f32.gmra.mrb[0].mxu0 %v679
      %v824 = vpop.f32.mrb[0].mxu0
      %v825 = vadd.f32 0.0, %v824
      %v826 = vpop.f32.mrb[0].mxu0
      %827 = vmatprep.mubr.f32.mxu0 0.0
      %828 = vmatmul.mubr.f32.gmra.mrb[0].mxu0 %v682
      %v829 = vpop.f32.mrb[0].mxu0
      %v830 = vadd.f32 0.0, %v829
      %v831 = vpop.f32.mrb[0].mxu0
      %832 = vdwg.mxu0
      %v833 = vmax.f32 %v755, 0.0
      %v834 = vmax.f32 %v760, 0.0
      %v835 = vmax.f32 %v765, 0.0
      %v836 = vmax.f32 %v770, 0.0
      %v837 = vmax.f32 %v775, 0.0
      %v838 = vmax.f32 %v780, 0.0
      %v839 = vmax.f32 %v785, 0.0
      %v840 = vmax.f32 %v790, 0.0
      %v841 = vmax.f32 %v795, 0.0
      %v842 = vmax.f32 %v800, 0.0
      %v843 = vmax.f32 %v805, 0.0
      %v844 = vmax.f32 %v810, 0.0
      %v845 = vmax.f32 %v815, 0.0
      %v846 = vmax.f32 %v820, 0.0
      %v847 = vmax.f32 %v825, 0.0
      %v848 = vmax.f32 %v830, 0.0
      %v849 = vlaneseq
      %v850 = vshrl.u32 %v849, 7
      %v851 = vadd.s32 %v850, 8
      %v852 = vadd.s32 %v850, 16
      %v853 = vadd.s32 %v850, 24
      %v854 = vadd.s32 %v850, 32
      %v855 = vadd.s32 %v850, 40
      %v856 = vadd.s32 %v850, 48
      %v857 = vadd.s32 %v850, 56
      %v858 = vadd.s32 %v850, 64
      %v859 = vadd.s32 %v850, 72
      %v860 = vadd.s32 %v850, 80
      %v861 = vadd.s32 %v850, 88
      %v862 = vadd.s32 %v850, 96
      %v863 = vadd.s32 %v850, 104
      %v864 = vadd.s32 %v850, 112
      %v865 = vadd.s32 %v850, 120
      %v866 = vlaneseq
      %v867 = vand.u32 %v866, 127
      %s868 = smul.u32 %s31, 16384
      %s869 = smul.u32 %s30, 128
      %s870 = sadd.s32 %s868, %s869
      %s871 = sld [smem:[#allocation9 + %s29]]
      %v872 = vmul.u32 %v850, 128
      %v873 = vmul.u32 %v851, 128
      %v874 = vmul.u32 %v852, 128
      %v875 = vmul.u32 %v853, 128
      %v876 = vmul.u32 %v854, 128
      %v877 = vmul.u32 %v855, 128
      %v878 = vmul.u32 %v856, 128
      %v879 = vmul.u32 %v857, 128
      %v880 = vmul.u32 %v858, 128
      %v881 = vmul.u32 %v859, 128
      %v882 = vmul.u32 %v860, 128
      %v883 = vmul.u32 %v861, 128
      %v884 = vmul.u32 %v862, 128
      %v885 = vmul.u32 %v863, 128
      %v886 = vmul.u32 %v864, 128
      %v887 = vmul.u32 %v865, 128
      %v888 = vadd.s32 %v872, %v867
      %v889 = vadd.s32 %v873, %v867
      %v890 = vadd.s32 %v874, %v867
      %v891 = vadd.s32 %v875, %v867
      %v892 = vadd.s32 %v876, %v867
      %v893 = vadd.s32 %v877, %v867
      %v894 = vadd.s32 %v878, %v867
      %v895 = vadd.s32 %v879, %v867
      %v896 = vadd.s32 %v880, %v867
      %v897 = vadd.s32 %v881, %v867
      %v898 = vadd.s32 %v882, %v867
      %v899 = vadd.s32 %v883, %v867
      %v900 = vadd.s32 %v884, %v867
      %v901 = vadd.s32 %v885, %v867
      %v902 = vadd.s32 %v886, %v867
      %v903 = vadd.s32 %v887, %v867
      %v904 = vstv %s870
      %v905 = vadd.s32 %v888, %v904
      %v906 = vadd.s32 %v889, %v904
      %v907 = vadd.s32 %v890, %v904
      %v908 = vadd.s32 %v891, %v904
      %v909 = vadd.s32 %v892, %v904
      %v910 = vadd.s32 %v893, %v904
      %v911 = vadd.s32 %v894, %v904
      %v912 = vadd.s32 %v895, %v904
      %v913 = vadd.s32 %v896, %v904
      %v914 = vadd.s32 %v897, %v904
      %v915 = vadd.s32 %v898, %v904
      %v916 = vadd.s32 %v899, %v904
      %v917 = vadd.s32 %v900, %v904
      %v918 = vadd.s32 %v901, %v904
      %v919 = vadd.s32 %v902, %v904
      %v920 = vadd.s32 %v903, %v904
      %v921 = vstv %s871
      %v922 = vxor.u32 %v905, %v921
      %v923 = vxor.u32 %v906, %v921
      %v924 = vxor.u32 %v907, %v921
      %v925 = vxor.u32 %v908, %v921
      %v926 = vxor.u32 %v909, %v921
      %v927 = vxor.u32 %v910, %v921
      %v928 = vxor.u32 %v911, %v921
      %v929 = vxor.u32 %v912, %v921
      %v930 = vxor.u32 %v913, %v921
      %v931 = vxor.u32 %v914, %v921
      %v932 = vxor.u32 %v915, %v921
      %v933 = vxor.u32 %v916, %v921
      %v934 = vxor.u32 %v917, %v921
      %v935 = vxor.u32 %v918, %v921
      %v936 = vxor.u32 %v919, %v921
      %v937 = vxor.u32 %v920, %v921
      %v938 = vshrl.u32 %v922, 16
      %v939 = vshrl.u32 %v923, 16
      %v940 = vshrl.u32 %v924, 16
      %v941 = vshrl.u32 %v925, 16
      %v942 = vshrl.u32 %v926, 16
      %v943 = vshrl.u32 %v927, 16
      %v944 = vshrl.u32 %v928, 16
      %v945 = vshrl.u32 %v929, 16
      %v946 = vshrl.u32 %v930, 16
      %v947 = vshrl.u32 %v931, 16
      %v948 = vshrl.u32 %v932, 16
      %v949 = vshrl.u32 %v933, 16
      %v950 = vshrl.u32 %v934, 16
      %v951 = vshrl.u32 %v935, 16
      %v952 = vshrl.u32 %v936, 16
      %v953 = vshrl.u32 %v937, 16
      %v954 = vxor.u32 %v922, %v938
      %v955 = vxor.u32 %v923, %v939
      %v956 = vxor.u32 %v924, %v940
      %v957 = vxor.u32 %v925, %v941
      %v958 = vxor.u32 %v926, %v942
      %v959 = vxor.u32 %v927, %v943
      %v960 = vxor.u32 %v928, %v944
      %v961 = vxor.u32 %v929, %v945
      %v962 = vxor.u32 %v930, %v946
      %v963 = vxor.u32 %v931, %v947
      %v964 = vxor.u32 %v932, %v948
      %v965 = vxor.u32 %v933, %v949
      %v966 = vxor.u32 %v934, %v950
      %v967 = vxor.u32 %v935, %v951
      %v968 = vxor.u32 %v936, %v952
      %v969 = vxor.u32 %v937, %v953
      %v970 = vmul.u32 %v954, 2246822507
      %v971 = vmul.u32 %v955, 2246822507
      %v972 = vmul.u32 %v956, 2246822507
      %v973 = vmul.u32 %v957, 2246822507
      %v974 = vmul.u32 %v958, 2246822507
      %v975 = vmul.u32 %v959, 2246822507
      %v976 = vmul.u32 %v960, 2246822507
      %v977 = vmul.u32 %v961, 2246822507
      %v978 = vmul.u32 %v962, 2246822507
      %v979 = vmul.u32 %v963, 2246822507
      %v980 = vmul.u32 %v964, 2246822507
      %v981 = vmul.u32 %v965, 2246822507
      %v982 = vmul.u32 %v966, 2246822507
      %v983 = vmul.u32 %v967, 2246822507
      %v984 = vmul.u32 %v968, 2246822507
      %v985 = vmul.u32 %v969, 2246822507
      %v986 = vshrl.u32 %v970, 13
      %v987 = vshrl.u32 %v971, 13
      %v988 = vshrl.u32 %v972, 13
      %v989 = vshrl.u32 %v973, 13
      %v990 = vshrl.u32 %v974, 13
      %v991 = vshrl.u32 %v975, 13
      %v992 = vshrl.u32 %v976, 13
      %v993 = vshrl.u32 %v977, 13
      %v994 = vshrl.u32 %v978, 13
      %v995 = vshrl.u32 %v979, 13
      %v996 = vshrl.u32 %v980, 13
      %v997 = vshrl.u32 %v981, 13
      %v998 = vshrl.u32 %v982, 13
      %v999 = vshrl.u32 %v983, 13
      %v1000 = vshrl.u32 %v984, 13
      %v1001 = vshrl.u32 %v985, 13
      %v1002 = vxor.u32 %v970, %v986
      %v1003 = vxor.u32 %v971, %v987
      %v1004 = vxor.u32 %v972, %v988
      %v1005 = vxor.u32 %v973, %v989
      %v1006 = vxor.u32 %v974, %v990
      %v1007 = vxor.u32 %v975, %v991
      %v1008 = vxor.u32 %v976, %v992
      %v1009 = vxor.u32 %v977, %v993
      %v1010 = vxor.u32 %v978, %v994
      %v1011 = vxor.u32 %v979, %v995
      %v1012 = vxor.u32 %v980, %v996
      %v1013 = vxor.u32 %v981, %v997
      %v1014 = vxor.u32 %v982, %v998
      %v1015 = vxor.u32 %v983, %v999
      %v1016 = vxor.u32 %v984, %v1000
      %v1017 = vxor.u32 %v985, %v1001
      %v1018 = vmul.u32 %v1002, 3266489909
      %v1019 = vmul.u32 %v1003, 3266489909
      %v1020 = vmul.u32 %v1004, 3266489909
      %v1021 = vmul.u32 %v1005, 3266489909
      %v1022 = vmul.u32 %v1006, 3266489909
      %v1023 = vmul.u32 %v1007, 3266489909
      %v1024 = vmul.u32 %v1008, 3266489909
      %v1025 = vmul.u32 %v1009, 3266489909
      %v1026 = vmul.u32 %v1010, 3266489909
      %v1027 = vmul.u32 %v1011, 3266489909
      %v1028 = vmul.u32 %v1012, 3266489909
      %v1029 = vmul.u32 %v1013, 3266489909
      %v1030 = vmul.u32 %v1014, 3266489909
      %v1031 = vmul.u32 %v1015, 3266489909
      %v1032 = vmul.u32 %v1016, 3266489909
      %v1033 = vmul.u32 %v1017, 3266489909
      %v1034 = vshrl.u32 %v1018, 16
      %v1035 = vshrl.u32 %v1019, 16
      %v1036 = vshrl.u32 %v1020, 16
      %v1037 = vshrl.u32 %v1021, 16
      %v1038 = vshrl.u32 %v1022, 16
      %v1039 = vshrl.u32 %v1023, 16
      %v1040 = vshrl.u32 %v1024, 16
      %v1041 = vshrl.u32 %v1025, 16
      %v1042 = vshrl.u32 %v1026, 16
      %v1043 = vshrl.u32 %v1027, 16
      %v1044 = vshrl.u32 %v1028, 16
      %v1045 = vshrl.u32 %v1029, 16
      %v1046 = vshrl.u32 %v1030, 16
      %v1047 = vshrl.u32 %v1031, 16
      %v1048 = vshrl.u32 %v1032, 16
      %v1049 = vshrl.u32 %v1033, 16
      %v1050 = vxor.u32 %v1018, %v1034
      %v1051 = vxor.u32 %v1019, %v1035
      %v1052 = vxor.u32 %v1020, %v1036
      %v1053 = vxor.u32 %v1021, %v1037
      %v1054 = vxor.u32 %v1022, %v1038
      %v1055 = vxor.u32 %v1023, %v1039
      %v1056 = vxor.u32 %v1024, %v1040
      %v1057 = vxor.u32 %v1025, %v1041
      %v1058 = vxor.u32 %v1026, %v1042
      %v1059 = vxor.u32 %v1027, %v1043
      %v1060 = vxor.u32 %v1028, %v1044
      %v1061 = vxor.u32 %v1029, %v1045
      %v1062 = vxor.u32 %v1030, %v1046
      %v1063 = vxor.u32 %v1031, %v1047
      %v1064 = vxor.u32 %v1032, %v1048
      %v1065 = vxor.u32 %v1033, %v1049
      %v1066 = vand.u32 %v1050, 16777215
      %v1067 = vand.u32 %v1051, 16777215
      %v1068 = vand.u32 %v1052, 16777215
      %v1069 = vand.u32 %v1053, 16777215
      %v1070 = vand.u32 %v1054, 16777215
      %v1071 = vand.u32 %v1055, 16777215
      %v1072 = vand.u32 %v1056, 16777215
      %v1073 = vand.u32 %v1057, 16777215
      %v1074 = vand.u32 %v1058, 16777215
      %v1075 = vand.u32 %v1059, 16777215
      %v1076 = vand.u32 %v1060, 16777215
      %v1077 = vand.u32 %v1061, 16777215
      %v1078 = vand.u32 %v1062, 16777215
      %v1079 = vand.u32 %v1063, 16777215
      %v1080 = vand.u32 %v1064, 16777215
      %v1081 = vand.u32 %v1065, 16777215
      %v1082 = vcvt.s32.f32 %v1066
      %v1083 = vcvt.s32.f32 %v1067
      %v1084 = vcvt.s32.f32 %v1068
      %v1085 = vcvt.s32.f32 %v1069
      %v1086 = vcvt.s32.f32 %v1070
      %v1087 = vcvt.s32.f32 %v1071
      %v1088 = vcvt.s32.f32 %v1072
      %v1089 = vcvt.s32.f32 %v1073
      %v1090 = vcvt.s32.f32 %v1074
      %v1091 = vcvt.s32.f32 %v1075
      %v1092 = vcvt.s32.f32 %v1076
      %v1093 = vcvt.s32.f32 %v1077
      %v1094 = vcvt.s32.f32 %v1078
      %v1095 = vcvt.s32.f32 %v1079
      %v1096 = vcvt.s32.f32 %v1080
      %v1097 = vcvt.s32.f32 %v1081
      %vm1098 = vcmp.le.f32.partialorder %v619, 0.25
      %vm1099 = vcmp.le.f32.partialorder %v620, 0.25
      %vm1100 = vcmp.le.f32.partialorder %v621, 0.25
      %vm1101 = vcmp.le.f32.partialorder %v622, 0.25
      %vm1102 = vcmp.le.f32.partialorder %v623, 0.25
      %vm1103 = vcmp.le.f32.partialorder %v624, 0.25
      %vm1104 = vcmp.le.f32.partialorder %v625, 0.25
      %vm1105 = vcmp.le.f32.partialorder %v626, 0.25
      %vm1106 = vcmp.le.f32.partialorder %v627, 0.25
      %vm1107 = vcmp.le.f32.partialorder %v628, 0.25
      %vm1108 = vcmp.le.f32.partialorder %v629, 0.25
      %vm1109 = vcmp.le.f32.partialorder %v630, 0.25
      %vm1110 = vcmp.le.f32.partialorder %v631, 0.25
      %vm1111 = vcmp.le.f32.partialorder %v632, 0.25
      %vm1112 = vcmp.le.f32.partialorder %v633, 0.25
      %vm1113 = vcmp.le.f32.partialorder %v634, 0.25
      %vm1114 = vmxor %vm1098, 1
      %vm1115 = vmxor %vm1099, 1
      %vm1116 = vmxor %vm1100, 1
      %vm1117 = vmxor %vm1101, 1
      %vm1118 = vmxor %vm1102, 1
      %vm1119 = vmxor %vm1103, 1
      %vm1120 = vmxor %vm1104, 1
      %vm1121 = vmxor %vm1105, 1
      %vm1122 = vmxor %vm1106, 1
      %vm1123 = vmxor %vm1107, 1
      %vm1124 = vmxor %vm1108, 1
      %vm1125 = vmxor %vm1109, 1
      %vm1126 = vmxor %vm1110, 1
      %vm1127 = vmxor %vm1111, 1
      %vm1128 = vmxor %vm1112, 1
      %vm1129 = vmxor %vm1113, 1
      %v1130 = vadd.f32 %v619, 1e+08
      %v1131 = vadd.f32 %v620, 1e+08
      %v1132 = vadd.f32 %v621, 1e+08
      %v1133 = vadd.f32 %v622, 1e+08
      %v1134 = vadd.f32 %v623, 1e+08
      %v1135 = vadd.f32 %v624, 1e+08
      %v1136 = vadd.f32 %v625, 1e+08
      %v1137 = vadd.f32 %v626, 1e+08
      %v1138 = vadd.f32 %v627, 1e+08
      %v1139 = vadd.f32 %v628, 1e+08
      %v1140 = vadd.f32 %v629, 1e+08
      %v1141 = vadd.f32 %v630, 1e+08
      %v1142 = vadd.f32 %v631, 1e+08
      %v1143 = vadd.f32 %v632, 1e+08
      %v1144 = vadd.f32 %v633, 1e+08
      %v1145 = vadd.f32 %v634, 1e+08
      %v1146 = vsel %vm1098, %v1130, %v619
      %v1147 = vsel %vm1099, %v1131, %v620
      %v1148 = vsel %vm1100, %v1132, %v621
      %v1149 = vsel %vm1101, %v1133, %v622
      %v1150 = vsel %vm1102, %v1134, %v623
      %v1151 = vsel %vm1103, %v1135, %v624
      %v1152 = vsel %vm1104, %v1136, %v625
      %v1153 = vsel %vm1105, %v1137, %v626
      %v1154 = vsel %vm1106, %v1138, %v627
      %v1155 = vsel %vm1107, %v1139, %v628
      %v1156 = vsel %vm1108, %v1140, %v629
      %v1157 = vsel %vm1109, %v1141, %v630
      %v1158 = vsel %vm1110, %v1142, %v631
      %v1159 = vsel %vm1111, %v1143, %v632
      %v1160 = vsel %vm1112, %v1144, %v633
      %v1161 = vsel %vm1113, %v1145, %v634
      %p1162 = scmp.eq.s32.totalorder %s31, 0
      // Predicated region
      $region37: #{desc_cgf_loss.1} parent=35 // pred_check
        %p1163 = pneg %p1162
      $region38: #{desc_cgf_loss.1} parent=35 // pred_check_branch
        %1165 = sbr.rel (%p1163) target = $region40
      $region39: #{desc_cgf_loss.1} parent=35 // pred_region
        %1166 = vst [vmem:[#allocation2] sm:$0x1] -1.0
        %1167 = vst [vmem:[#allocation3] sm:$0x1] 0.0
        %1168 = vst [vmem:[#allocation4] sm:$0x1] 3e+38
        %1169 = vst [vmem:[#allocation5] sm:$0x1] 0.0
        %1170 = vst [vmem:[#allocation6] sm:$0x1] -1.0
        %1171 = vst [vmem:[#allocation7] sm:$0x1] %v833
      $region40: #{desc_cgf_loss.1} parent=35 // pred_fallthru
        _
      %v1172 = vsel %vm1098, %v1082, -1.0
      %v1173 = vsel %vm1099, %v1083, -1.0
      %v1174 = vsel %vm1100, %v1084, -1.0
      %v1175 = vsel %vm1101, %v1085, -1.0
      %v1176 = vsel %vm1102, %v1086, -1.0
      %v1177 = vsel %vm1103, %v1087, -1.0
      %v1178 = vsel %vm1104, %v1088, -1.0
      %v1179 = vsel %vm1105, %v1089, -1.0
      %v1180 = vsel %vm1106, %v1090, -1.0
      %v1181 = vsel %vm1107, %v1091, -1.0
      %v1182 = vsel %vm1108, %v1092, -1.0
      %v1183 = vsel %vm1109, %v1093, -1.0
      %v1184 = vsel %vm1110, %v1094, -1.0
      %v1185 = vsel %vm1111, %v1095, -1.0
      %v1186 = vsel %vm1112, %v1096, -1.0
      %v1187 = vsel %vm1113, %v1097, -1.0
      %v1188 = vmax.f32 %v1172, %v1176
      %v1189 = vmax.f32 %v1173, %v1177
      %v1190 = vmax.f32 %v1174, %v1178
      %v1191 = vmax.f32 %v1175, %v1179
      %v1192 = vmax.f32 %v1188, %v1180
      %v1193 = vmax.f32 %v1189, %v1181
      %v1194 = vmax.f32 %v1190, %v1182
      %v1195 = vmax.f32 %v1191, %v1183
      %v1196 = vmax.f32 %v1192, %v1184
      %v1197 = vmax.f32 %v1193, %v1185
      %v1198 = vmax.f32 %v1194, %v1186
      %v1199 = vmax.f32 %v1195, %v1187
      %v1200 = vmax.f32 %v1196, %v1197
      %v1201 = vmax.f32 %v1198, %v1199
      %v1202 = vmax.f32 %v1200, %v1201
      %v1203 = vrot.slane %v1202, 4
      %v1204 = vmax.f32 %v1202, %v1203
      %v1205 = vrot.slane %v1204, 2
      %v1206 = vmax.f32 %v1204, %v1205
      %v1207 = vrot.slane %v1206, 1
      %v1208 = vmax.f32 %v1206, %v1207
      %vm1209 = vcmp.eq.f32.partialorder %v1172, %v1208
      %vm1210 = vcmp.eq.f32.partialorder %v1173, %v1208
      %vm1211 = vcmp.eq.f32.partialorder %v1174, %v1208
      %vm1212 = vcmp.eq.f32.partialorder %v1175, %v1208
      %vm1213 = vcmp.eq.f32.partialorder %v1176, %v1208
      %vm1214 = vcmp.eq.f32.partialorder %v1177, %v1208
      %vm1215 = vcmp.eq.f32.partialorder %v1178, %v1208
      %vm1216 = vcmp.eq.f32.partialorder %v1179, %v1208
      %vm1217 = vcmp.eq.f32.partialorder %v1180, %v1208
      %vm1218 = vcmp.eq.f32.partialorder %v1181, %v1208
      %vm1219 = vcmp.eq.f32.partialorder %v1182, %v1208
      %vm1220 = vcmp.eq.f32.partialorder %v1183, %v1208
      %vm1221 = vcmp.eq.f32.partialorder %v1184, %v1208
      %vm1222 = vcmp.eq.f32.partialorder %v1185, %v1208
      %vm1223 = vcmp.eq.f32.partialorder %v1186, %v1208
      %vm1224 = vcmp.eq.f32.partialorder %v1187, %v1208
      %v1225 = vsel %vm1209, %v833, -1.0
      %v1226 = vsel %vm1210, %v834, -1.0
      %v1227 = vsel %vm1211, %v835, -1.0
      %v1228 = vsel %vm1212, %v836, -1.0
      %v1229 = vsel %vm1213, %v837, -1.0
      %v1230 = vsel %vm1214, %v838, -1.0
      %v1231 = vsel %vm1215, %v839, -1.0
      %v1232 = vsel %vm1216, %v840, -1.0
      %v1233 = vsel %vm1217, %v841, -1.0
      %v1234 = vsel %vm1218, %v842, -1.0
      %v1235 = vsel %vm1219, %v843, -1.0
      %v1236 = vsel %vm1220, %v844, -1.0
      %v1237 = vsel %vm1221, %v845, -1.0
      %v1238 = vsel %vm1222, %v846, -1.0
      %v1239 = vsel %vm1223, %v847, -1.0
      %v1240 = vsel %vm1224, %v848, -1.0
      %v1241 = vmax.f32 %v1225, %v1229
      %v1242 = vmax.f32 %v1226, %v1230
      %v1243 = vmax.f32 %v1227, %v1231
      %v1244 = vmax.f32 %v1228, %v1232
      %v1245 = vmax.f32 %v1241, %v1233
      %v1246 = vmax.f32 %v1242, %v1234
      %v1247 = vmax.f32 %v1243, %v1235
      %v1248 = vmax.f32 %v1244, %v1236
      %v1249 = vmax.f32 %v1245, %v1237
      %v1250 = vmax.f32 %v1246, %v1238
      %v1251 = vmax.f32 %v1247, %v1239
      %v1252 = vmax.f32 %v1248, %v1240
      %v1253 = vmax.f32 %v1249, %v1250
      %v1254 = vmax.f32 %v1251, %v1252
      %v1255 = vmax.f32 %v1253, %v1254
      %v1256 = vrot.slane %v1255, 4
      %v1257 = vmax.f32 %v1255, %v1256
      %v1258 = vrot.slane %v1257, 2
      %v1259 = vmax.f32 %v1257, %v1258
      %v1260 = vrot.slane %v1259, 1
      %v1261 = vmax.f32 %v1259, %v1260
      %v1262 = vld [vmem:[#allocation2] sm:$0x1]
      %vm1263 = vcmp.gt.f32.partialorder %v1208, %v1262
      %v1264 = vld [vmem:[#allocation3] sm:$0x1]
      %v1265 = vsel %vm1263, %v1261, %v1264
      %1266 = vst [vmem:[#allocation3] sm:$0x1] %v1265
      %v1267 = vld [vmem:[#allocation2] sm:$0x1]
      %v1268 = vsel %vm1263, %v1208, %v1267
      %1269 = vst [vmem:[#allocation2] sm:$0x1] %v1268
      %v1270 = vsel %vm1114, %v1082, -1.0
      %v1271 = vsel %vm1115, %v1083, -1.0
      %v1272 = vsel %vm1116, %v1084, -1.0
      %v1273 = vsel %vm1117, %v1085, -1.0
      %v1274 = vsel %vm1118, %v1086, -1.0
      %v1275 = vsel %vm1119, %v1087, -1.0
      %v1276 = vsel %vm1120, %v1088, -1.0
      %v1277 = vsel %vm1121, %v1089, -1.0
      %v1278 = vsel %vm1122, %v1090, -1.0
      %v1279 = vsel %vm1123, %v1091, -1.0
      %v1280 = vsel %vm1124, %v1092, -1.0
      %v1281 = vsel %vm1125, %v1093, -1.0
      %v1282 = vsel %vm1126, %v1094, -1.0
      %v1283 = vsel %vm1127, %v1095, -1.0
      %v1284 = vsel %vm1128, %v1096, -1.0
      %v1285 = vsel %vm1129, %v1097, -1.0
      %v1286 = vmax.f32 %v1270, %v1274
      %v1287 = vmax.f32 %v1271, %v1275
      %v1288 = vmax.f32 %v1272, %v1276
      %v1289 = vmax.f32 %v1273, %v1277
      %v1290 = vmax.f32 %v1286, %v1278
      %v1291 = vmax.f32 %v1287, %v1279
      %v1292 = vmax.f32 %v1288, %v1280
      %v1293 = vmax.f32 %v1289, %v1281
      %v1294 = vmax.f32 %v1290, %v1282
      %v1295 = vmax.f32 %v1291, %v1283
      %v1296 = vmax.f32 %v1292, %v1284
      %v1297 = vmax.f32 %v1293, %v1285
      %v1298 = vmax.f32 %v1294, %v1295
      %v1299 = vmax.f32 %v1296, %v1297
      %v1300 = vmax.f32 %v1298, %v1299
      %v1301 = vrot.slane %v1300, 4
      %v1302 = vmax.f32 %v1300, %v1301
      %v1303 = vrot.slane %v1302, 2
      %v1304 = vmax.f32 %v1302, %v1303
      %v1305 = vrot.slane %v1304, 1
      %v1306 = vmax.f32 %v1304, %v1305
      %vm1307 = vcmp.eq.f32.partialorder %v1270, %v1306
      %vm1308 = vcmp.eq.f32.partialorder %v1271, %v1306
      %vm1309 = vcmp.eq.f32.partialorder %v1272, %v1306
      %vm1310 = vcmp.eq.f32.partialorder %v1273, %v1306
      %vm1311 = vcmp.eq.f32.partialorder %v1274, %v1306
      %vm1312 = vcmp.eq.f32.partialorder %v1275, %v1306
      %vm1313 = vcmp.eq.f32.partialorder %v1276, %v1306
      %vm1314 = vcmp.eq.f32.partialorder %v1277, %v1306
      %vm1315 = vcmp.eq.f32.partialorder %v1278, %v1306
      %vm1316 = vcmp.eq.f32.partialorder %v1279, %v1306
      %vm1317 = vcmp.eq.f32.partialorder %v1280, %v1306
      %vm1318 = vcmp.eq.f32.partialorder %v1281, %v1306
      %vm1319 = vcmp.eq.f32.partialorder %v1282, %v1306
      %vm1320 = vcmp.eq.f32.partialorder %v1283, %v1306
      %vm1321 = vcmp.eq.f32.partialorder %v1284, %v1306
      %vm1322 = vcmp.eq.f32.partialorder %v1285, %v1306
      %v1323 = vsel %vm1307, %v833, -1.0
      %v1324 = vsel %vm1308, %v834, -1.0
      %v1325 = vsel %vm1309, %v835, -1.0
      %v1326 = vsel %vm1310, %v836, -1.0
      %v1327 = vsel %vm1311, %v837, -1.0
      %v1328 = vsel %vm1312, %v838, -1.0
      %v1329 = vsel %vm1313, %v839, -1.0
      %v1330 = vsel %vm1314, %v840, -1.0
      %v1331 = vsel %vm1315, %v841, -1.0
      %v1332 = vsel %vm1316, %v842, -1.0
      %v1333 = vsel %vm1317, %v843, -1.0
      %v1334 = vsel %vm1318, %v844, -1.0
      %v1335 = vsel %vm1319, %v845, -1.0
      %v1336 = vsel %vm1320, %v846, -1.0
      %v1337 = vsel %vm1321, %v847, -1.0
      %v1338 = vsel %vm1322, %v848, -1.0
      %v1339 = vmax.f32 %v1323, %v1327
      %v1340 = vmax.f32 %v1324, %v1328
      %v1341 = vmax.f32 %v1325, %v1329
      %v1342 = vmax.f32 %v1326, %v1330
      %v1343 = vmax.f32 %v1339, %v1331
      %v1344 = vmax.f32 %v1340, %v1332
      %v1345 = vmax.f32 %v1341, %v1333
      %v1346 = vmax.f32 %v1342, %v1334
      %v1347 = vmax.f32 %v1343, %v1335
      %v1348 = vmax.f32 %v1344, %v1336
      %v1349 = vmax.f32 %v1345, %v1337
      %v1350 = vmax.f32 %v1346, %v1338
      %v1351 = vmax.f32 %v1347, %v1348
      %v1352 = vmax.f32 %v1349, %v1350
      %v1353 = vmax.f32 %v1351, %v1352
      %v1354 = vrot.slane %v1353, 4
      %v1355 = vmax.f32 %v1353, %v1354
      %v1356 = vrot.slane %v1355, 2
      %v1357 = vmax.f32 %v1355, %v1356
      %v1358 = vrot.slane %v1357, 1
      %v1359 = vmax.f32 %v1357, %v1358
      %v1360 = vld [vmem:[#allocation6] sm:$0x1]
      %vm1361 = vcmp.gt.f32.partialorder %v1306, %v1360
      %v1362 = vld [vmem:[#allocation7] sm:$0x1]
      %v1363 = vsel %vm1361, %v1359, %v1362
      %1364 = vst [vmem:[#allocation7] sm:$0x1] %v1363
      %v1365 = vld [vmem:[#allocation6] sm:$0x1]
      %v1366 = vsel %vm1361, %v1306, %v1365
      %1367 = vst [vmem:[#allocation6] sm:$0x1] %v1366
      %v1368 = vmin.f32 %v1146, %v1150
      %v1369 = vmin.f32 %v1147, %v1151
      %v1370 = vmin.f32 %v1148, %v1152
      %v1371 = vmin.f32 %v1149, %v1153
      %v1372 = vmin.f32 %v1368, %v1154
      %v1373 = vmin.f32 %v1369, %v1155
      %v1374 = vmin.f32 %v1370, %v1156
      %v1375 = vmin.f32 %v1371, %v1157
      %v1376 = vmin.f32 %v1372, %v1158
      %v1377 = vmin.f32 %v1373, %v1159
      %v1378 = vmin.f32 %v1374, %v1160
      %v1379 = vmin.f32 %v1375, %v1161
      %v1380 = vmin.f32 %v1376, %v1377
      %v1381 = vmin.f32 %v1378, %v1379
      %v1382 = vmin.f32 %v1380, %v1381
      %v1383 = vrot.slane %v1382, 4
      %v1384 = vmin.f32 %v1382, %v1383
      %v1385 = vrot.slane %v1384, 2
      %v1386 = vmin.f32 %v1384, %v1385
      %v1387 = vrot.slane %v1386, 1
      %v1388 = vmin.f32 %v1386, %v1387
      %vm1389 = vcmp.eq.f32.partialorder %v1146, %v1388
      %vm1390 = vcmp.eq.f32.partialorder %v1147, %v1388
      %vm1391 = vcmp.eq.f32.partialorder %v1148, %v1388
      %vm1392 = vcmp.eq.f32.partialorder %v1149, %v1388
      %vm1393 = vcmp.eq.f32.partialorder %v1150, %v1388
      %vm1394 = vcmp.eq.f32.partialorder %v1151, %v1388
      %vm1395 = vcmp.eq.f32.partialorder %v1152, %v1388
      %vm1396 = vcmp.eq.f32.partialorder %v1153, %v1388
      %vm1397 = vcmp.eq.f32.partialorder %v1154, %v1388
      %vm1398 = vcmp.eq.f32.partialorder %v1155, %v1388
      %vm1399 = vcmp.eq.f32.partialorder %v1156, %v1388
      %vm1400 = vcmp.eq.f32.partialorder %v1157, %v1388
      %vm1401 = vcmp.eq.f32.partialorder %v1158, %v1388
      %vm1402 = vcmp.eq.f32.partialorder %v1159, %v1388
      %vm1403 = vcmp.eq.f32.partialorder %v1160, %v1388
      %vm1404 = vcmp.eq.f32.partialorder %v1161, %v1388
      %v1405 = vsel %vm1389, %v833, -1.0
      %v1406 = vsel %vm1390, %v834, -1.0
      %v1407 = vsel %vm1391, %v835, -1.0
      %v1408 = vsel %vm1392, %v836, -1.0
      %v1409 = vsel %vm1393, %v837, -1.0
      %v1410 = vsel %vm1394, %v838, -1.0
      %v1411 = vsel %vm1395, %v839, -1.0
      %v1412 = vsel %vm1396, %v840, -1.0
      %v1413 = vsel %vm1397, %v841, -1.0
      %v1414 = vsel %vm1398, %v842, -1.0
      %v1415 = vsel %vm1399, %v843, -1.0
      %v1416 = vsel %vm1400, %v844, -1.0
      %v1417 = vsel %vm1401, %v845, -1.0
      %v1418 = vsel %vm1402, %v846, -1.0
      %v1419 = vsel %vm1403, %v847, -1.0
      %v1420 = vsel %vm1404, %v848, -1.0
      %v1421 = vmax.f32 %v1405, %v1409
      %v1422 = vmax.f32 %v1406, %v1410
      %v1423 = vmax.f32 %v1407, %v1411
      %v1424 = vmax.f32 %v1408, %v1412
      %v1425 = vmax.f32 %v1421, %v1413
      %v1426 = vmax.f32 %v1422, %v1414
      %v1427 = vmax.f32 %v1423, %v1415
      %v1428 = vmax.f32 %v1424, %v1416
      %v1429 = vmax.f32 %v1425, %v1417
      %v1430 = vmax.f32 %v1426, %v1418
      %v1431 = vmax.f32 %v1427, %v1419
      %v1432 = vmax.f32 %v1428, %v1420
      %v1433 = vmax.f32 %v1429, %v1430
      %v1434 = vmax.f32 %v1431, %v1432
      %v1435 = vmax.f32 %v1433, %v1434
      %v1436 = vrot.slane %v1435, 4
      %v1437 = vmax.f32 %v1435, %v1436
      %v1438 = vrot.slane %v1437, 2
      %v1439 = vmax.f32 %v1437, %v1438
      %v1440 = vrot.slane %v1439, 1
      %v1441 = vmax.f32 %v1439, %v1440
      %v1442 = vld [vmem:[#allocation4] sm:$0x1]
      %vm1443 = vcmp.lt.f32.partialorder %v1388, %v1442
      %v1444 = vld [vmem:[#allocation5] sm:$0x1]
      %v1445 = vsel %vm1443, %v1441, %v1444
      %1446 = vst [vmem:[#allocation5] sm:$0x1] %v1445
      %v1447 = vld [vmem:[#allocation4] sm:$0x1]
      %v1448 = vsel %vm1443, %v1388, %v1447
      %1449 = vst [vmem:[#allocation4] sm:$0x1] %v1448
      // Predicated region
      $region41: #{desc_cgf_loss.1} parent=35 // pred_check
        %p1450 = pneg %p1162
      $region42: #{desc_cgf_loss.1} parent=35 // pred_check_branch
        %1452 = sbr.rel (%p1450) target = $region44
      $region43: #{desc_cgf_loss.1} parent=35 // pred_region
        %v1453 = vld [vmem:[#allocation2] sm:$0x1]
        %vm1454 = vcmp.ge.f32.partialorder %v1453, 0.0
        %v1455 = vsel %vm1454, 1, 0
        %v1456 = vcvt.s32.f32 %v1455
        %v1457 = vld [vmem:[#allocation3] sm:$0x1]
        %v1458 = vrsqrt.pop %v1457
        %v1459 = vmul.f32 %v1457, %v1458
        %vm1460 = vcmp.eq.f32.partialorder %v1457, inf
        %v1461 = vsel %vm1460, %v1457, %v1459
        %vm1462 = vcmp.eq.f32.partialorder %v1457, 0.0
        %v1463 = vand.u32 %v1457, 2147483648
        %v1464 = vsel %vm1462, %v1463, %v1461
        %v1465 = vld [vmem:[#allocation5] sm:$0x1]
        %v1466 = vrsqrt.pop %v1465
        %v1467 = vmul.f32 %v1465, %v1466
        %vm1468 = vcmp.eq.f32.partialorder %v1465, inf
        %v1469 = vsel %vm1468, %v1465, %v1467
        %vm1470 = vcmp.eq.f32.partialorder %v1465, 0.0
        %v1471 = vand.u32 %v1465, 2147483648
        %v1472 = vsel %vm1470, %v1471, %v1469
        %v1473 = vld [vmem:[#allocation7] sm:$0x1]
        %v1474 = vrsqrt.pop %v1473
        %v1475 = vmul.f32 %v1473, %v1474
        %vm1476 = vcmp.eq.f32.partialorder %v1473, inf
        %v1477 = vsel %vm1476, %v1473, %v1475
        %vm1478 = vcmp.eq.f32.partialorder %v1473, 0.0
        %v1479 = vand.u32 %v1473, 2147483648
        %v1480 = vsel %vm1478, %v1479, %v1477
        %v1481 = vstv %s869
        %v1482 = vadd.s32 %v867, %v1481
        %v1483 = vxor.u32 %v1482, %v921
        %v1484 = vxor.u32 %v1483, 2769414579
        %v1485 = vshrl.u32 %v1484, 16
        %v1486 = vxor.u32 %v1484, %v1485
        %v1487 = vmul.u32 %v1486, 2246822507
        %v1488 = vshrl.u32 %v1487, 13
        %v1489 = vxor.u32 %v1487, %v1488
        %v1490 = vmul.u32 %v1489, 3266489909
        %v1491 = vshrl.u32 %v1490, 16
        %v1492 = vxor.u32 %v1490, %v1491
        %v1493 = vand.u32 %v1492, 1
        %vm1494 = vcmp.eq.s32.totalorder %v1493, 0
        %v1495 = vsel %vm1494, %v1472, %v1480
        %v1496 = vsub.f32 %v1464, %v1495
        %v1497 = vadd.f32 %v1496, 0.2
        %v1498 = vmul.f32 %v1497, %v1456
        %1499 = vst [vmem:[%s376] sm:$0x1] %v1498
        %1500 = vst [vmem:[%s382] sm:$0x1] %v1456
      $region44: #{desc_cgf_loss.1} parent=35 // pred_fallthru
        _
      %p1501 = scmp.lt.s32.totalorder %s29, 1
      %s1502 = scalar_select %p1501, %s29, 1
      %p1503 = scmp.lt.s32.totalorder %s30, 0
      %s1504 = scalar_select %p1503, %s30, 0
      %s1505 = sadd.s32 %s1504, %s1502
      %s1506 = scalar_lea.vmem %s5, %s1505
      %p1507 = scmp.lt.s32.totalorder %s29, 1
      %s1508 = scalar_select %p1507, %s29, 1
      %p1509 = scmp.lt.s32.totalorder %s30, 0
      %s1510 = scalar_select %p1509, %s30, 0
      %s1511 = sadd.s32 %s1510, %s1508
      %s1512 = scalar_lea.vmem %s6, %s1511
      // Predicated region
      $region45: #{desc_cgf_loss.1} parent=35 // pred_check
        %p1513 = pneg %p175
      $region46: #{desc_cgf_loss.1} parent=35 // pred_check_branch
        %1515 = sbr.rel (%p1513) target = $region48
      $region47: #{desc_cgf_loss.1} parent=35 // pred_region
        _
      $region48: #{desc_cgf_loss.1} parent=35 // pred_fallthru
        _
      // Predicated region
      $region49: #{desc_cgf_loss.1} parent=35 // pred_check
        %p1516 = pneg %p203
      $region50: #{desc_cgf_loss.1} parent=35 // pred_check_branch
        %1518 = sbr.rel (%p1516) target = $region52
      $region51: #{desc_cgf_loss.1} parent=35 // pred_region
        _
      $region52: #{desc_cgf_loss.1} parent=35 // pred_fallthru
        _
    $region36: #{desc_cgf_loss.1} parent=5 // pred_fallthru
      _
    %p1519 = scmp.le.s32.totalorder 2, %s19
    // Predicated region
    $region53: #{desc_cgf_loss.1} parent=5 // pred_check
      %p1520 = pneg %p1519
    $region54: #{desc_cgf_loss.1} parent=5 // pred_check_branch
      %1522 = sbr.rel (%p1520) target = $region56
    $region55: #{desc_cgf_loss.1} parent=5 // pred_region
      %s1523 = ssub.s32 %s19, 2
      // Predicated region
      $region57: #{desc_cgf_loss.1} parent=55 // pred_check
        %p1524 = pneg %p181
      $region58: #{desc_cgf_loss.1} parent=55 // pred_check_branch
        %1526 = sbr.rel (%p1524) target = $region60
      $region59: #{desc_cgf_loss.1} parent=55 // pred_region
        %p1527 = scmp.lt.s32.totalorder %s32, 1
        %s1528 = scalar_select %p1527, %s32, 1
        %p1529 = scmp.lt.s32.totalorder %s33, 0
        %s1530 = scalar_select %p1529, %s33, 0
        %s1531 = sadd.s32 %s1530, %s1528
        %s1532 = scalar_lea.vmem %s5, %s1531
      $region60: #{desc_cgf_loss.1} parent=55 // pred_fallthru
        _
      // Predicated region
      $region61: #{desc_cgf_loss.1} parent=55 // pred_check
        %p1533 = pneg %p209
      $region62: #{desc_cgf_loss.1} parent=55 // pred_check_branch
        %1535 = sbr.rel (%p1533) target = $region64
      $region63: #{desc_cgf_loss.1} parent=55 // pred_region
        %p1536 = scmp.lt.s32.totalorder %s32, 1
        %s1537 = scalar_select %p1536, %s32, 1
        %p1538 = scmp.lt.s32.totalorder %s33, 0
        %s1539 = scalar_select %p1538, %s33, 0
        %s1540 = sadd.s32 %s1539, %s1537
        %s1541 = scalar_lea.vmem %s6, %s1540
      $region64: #{desc_cgf_loss.1} parent=55 // pred_fallthru
        _
    $region56: #{desc_cgf_loss.1} parent=5 // pred_fallthru
      _
  $region6: #{desc_cgf_loss.1} parent=0 // loop_footer
    %s23 = sadd.s32 1, %s19
  $region7: #{desc_cgf_loss.1} parent=0 // loop_footer_branch
    %18 = sbr.rel target = $region3
  $region8: #{desc_cgf_loss.1} parent=0 // loop_exit
    _

</llo_original>
